<compile_context>
chip_gen: v7x
topology: tpu7x:2x2x1
jax: 0.10.0
libtpu: 0.0.40
codegen_flags: <defaults>
</compile_context>

<pallas_src>
import functools

import jax
import jax.numpy as jnp
from jax.experimental import pallas as pl
from jax.experimental.pallas import tpu as pltpu

EPS = 1e-6
NEG_INF = -1e9
MM_DTYPE = jnp.bfloat16  # matmul-operand dtype; accumulation stays f32


# --------------------------------------------------------------------------------------
# in-kernel helpers
# --------------------------------------------------------------------------------------
def _layernorm_f32(x, a, b, *, eps=EPS):
    """torch LayerNorm semantics: unbiased std, (std + eps) denominator. x: (S, D) f32."""
    d = x.shape[-1]
    mean = jnp.mean(x, axis=-1, keepdims=True)
    var = jnp.sum((x - mean) ** 2, axis=-1, keepdims=True) / (d - 1)
    inv = pl.reciprocal(jnp.sqrt(var) + eps, approx=True)   # EUP slot, nearly free
    return a * (x - mean) * inv + b


def _attention_core(q, k, v, bias, num_heads):
    """Batched multi-head attention core (inside kernel).

    q: (Sq, D) f32, k/v: (Sk, D) f32, bias broadcastable to (H, Sq, Sk) additive f32.
    Returns the concatenated head outputs (Sq, D) in f32 (before the output projection).
    """
    sq, d = q.shape
    sk = k.shape[0]
    dk = d // num_heads
    scale = 1.0 / jnp.sqrt(jnp.float32(dk))

    qh = q.reshape(sq, num_heads, dk).transpose(1, 0, 2)   # (H, Sq, dk)
    kh = k.reshape(sk, num_heads, dk).transpose(1, 0, 2)   # (H, Sk, dk)
    vh = v.reshape(sk, num_heads, dk).transpose(1, 0, 2)   # (H, Sk, dk)

    scores = jnp.einsum("hqd,hkd->hqk",
                        qh.astype(MM_DTYPE), kh.astype(MM_DTYPE),
                        preferred_element_type=jnp.float32) * scale       # (H, Sq, Sk) f32
    scores = scores + bias                                                # additive mask
    m = jnp.max(scores, axis=-1, keepdims=True)
    e = jnp.exp(scores - m)
    p = e * pl.reciprocal(jnp.sum(e, axis=-1, keepdims=True), approx=True)

    ctx = jnp.einsum("hqk,hkd->hqd",
                     p.astype(MM_DTYPE), vh.astype(MM_DTYPE),
                     preferred_element_type=jnp.float32)                  # (H, Sq, dk)
    return ctx.transpose(1, 0, 2).reshape(sq, d)


# --------------------------------------------------------------------------------------
# fused encoder stack kernel: grid = (batch, layer)
# --------------------------------------------------------------------------------------
def encoder_stack_kernel(x_ref, bias_ref,
                         ln1a, ln1b, wqkv, bqkv, wo, bo,
                         ln2a, ln2b, w1, b1, w2, b2,
                         fina, finb, o_ref, *, num_heads):
    l = pl.program_id(1)

    @pl.when(l == 0)
    def _():
        o_ref[...] = x_ref[...]          # seed the resident accumulator

    x = o_ref[0].astype(jnp.float32)     # (S, D)
    _, d = x.shape
    bias = bias_ref[0]                   # (1, S) additive mask bias

    # ---- sublayer 1: x + self_attn(norm(x)) ----
    xn = _layernorm_f32(x, ln1a[0], ln1b[0])
    qkv = jnp.dot(xn.astype(MM_DTYPE), wqkv[0],
                  preferred_element_type=jnp.float32) + bqkv[0]           # (S, 3D)
    q, k, v = qkv[:, :d], qkv[:, d:2 * d], qkv[:, 2 * d:]
    ctx = _attention_core(q, k, v, bias, num_heads)
    x = x + (jnp.dot(ctx.astype(MM_DTYPE), wo[0],
                     preferred_element_type=jnp.float32) + bo[0])

    # ---- sublayer 2: x + ffn(norm(x)) ----
    xn2 = _layernorm_f32(x, ln2a[0], ln2b[0])
    h = jnp.maximum(jnp.dot(xn2.astype(MM_DTYPE), w1[0],
                            preferred_element_type=jnp.float32) + b1[0], 0.0)
    x = x + (jnp.dot(h.astype(MM_DTYPE), w2[0],
                     preferred_element_type=jnp.float32) + b2[0])

    o_ref[0] = x.astype(o_ref.dtype)

    @pl.when(l == pl.num_programs(1) - 1)
    def _():
        xf = o_ref[0].astype(jnp.float32)
        o_ref[0] = _layernorm_f32(xf, fina[...], finb[...]).astype(o_ref.dtype)


# --------------------------------------------------------------------------------------
# fused decoder stack kernel: grid = (batch, layer)
# --------------------------------------------------------------------------------------
def decoder_stack_kernel(y_ref, mem_ref, tbias_ref, sbias_ref,
                         ln1a, ln1b, wqkv, bqkv, wo1, bo1,
                         ln2a, ln2b, wq, bq, wkv, bkv, wo2, bo2,
                         ln3a, ln3b, w1, b1, w2, b2,
                         fina, finb, o_ref, *, num_heads):
    l = pl.program_id(1)

    @pl.when(l == 0)
    def _():
        o_ref[...] = y_ref[...]

    x = o_ref[0].astype(jnp.float32)     # (St, D)
    _, d = x.shape
    mem = mem_ref[0]                     # (Ss, D) already in MM_DTYPE
    tbias = tbias_ref[0]                 # (St, St)
    sbias = sbias_ref[0]                 # (1, Ss)

    # ---- sublayer 1: masked self-attention ----
    xn = _layernorm_f32(x, ln1a[0], ln1b[0])
    qkv = jnp.dot(xn.astype(MM_DTYPE), wqkv[0],
                  preferred_element_type=jnp.float32) + bqkv[0]
    q, k, v = qkv[:, :d], qkv[:, d:2 * d], qkv[:, 2 * d:]
    ctx = _attention_core(q, k, v, tbias, num_heads)
    x = x + (jnp.dot(ctx.astype(MM_DTYPE), wo1[0],
                     preferred_element_type=jnp.float32) + bo1[0])

    # ---- sublayer 2: cross-attention over encoder memory ----
    xn2 = _layernorm_f32(x, ln2a[0], ln2b[0])
    qc = jnp.dot(xn2.astype(MM_DTYPE), wq[0],
                 preferred_element_type=jnp.float32) + bq[0]              # (St, D)
    kvc = jnp.dot(mem, wkv[0],
                  preferred_element_type=jnp.float32) + bkv[0]            # (Ss, 2D)
    kc, vc = kvc[:, :d], kvc[:, d:]
    ctx2 = _attention_core(qc, kc, vc, sbias, num_heads)
    x = x + (jnp.dot(ctx2.astype(MM_DTYPE), wo2[0],
                     preferred_element_type=jnp.float32) + bo2[0])

    # ---- sublayer 3: feed-forward ----
    xn3 = _layernorm_f32(x, ln3a[0], ln3b[0])
    h = jnp.maximum(jnp.dot(xn3.astype(MM_DTYPE), w1[0],
                            preferred_element_type=jnp.float32) + b1[0], 0.0)
    x = x + (jnp.dot(h.astype(MM_DTYPE), w2[0],
                     preferred_element_type=jnp.float32) + b2[0])

    o_ref[0] = x.astype(o_ref.dtype)

    @pl.when(l == pl.num_programs(1) - 1)
    def _():
        xf = o_ref[0].astype(jnp.float32)
        o_ref[0] = _layernorm_f32(xf, fina[...], finb[...]).astype(o_ref.dtype)


# --------------------------------------------------------------------------------------
# wrappers
# --------------------------------------------------------------------------------------
def _stacked_spec(arr):
    # per-layer stacked parameter (L, a, b): one layer slab per grid step along axis 1.
    return pl.BlockSpec((1,) + arr.shape[1:], lambda b, l: (l, 0, 0))


def _final_spec(arr):
    return pl.BlockSpec(arr.shape, lambda b, l: (0, 0))


_ENC_STACKED = ["ln1_a", "ln1_b", "wqkv", "bqkv", "wo", "bo",
                "ln2_a", "ln2_b", "w1", "b1", "w2", "b2"]
_DEC_STACKED = ["ln1_a", "ln1_b", "wqkv", "bqkv", "wo1", "bo1",
                "ln2_a", "ln2_b", "wq", "bq", "wkv", "bkv", "wo2", "bo2",
                "ln3_a", "ln3_b", "w1", "b1", "w2", "b2"]

_COMPILER_PARAMS = pltpu.CompilerParams(
    dimension_semantics=("parallel", "arbitrary"),   # batch across cores, layers sequential
    vmem_limit_bytes=32 * 1024 * 1024,               # safe on v5e/v6e (128 MiB) and v7x (64 MiB)
)


def encoder_forward(src, src_bias, p, *, num_heads):
    B, S, D = src.shape
    L = p["wqkv"].shape[0]
    args = [src, src_bias] + [p[k] for k in _ENC_STACKED] + [p["final_a"], p["final_b"]]
    in_specs = ([pl.BlockSpec((1, S, D), lambda b, l: (b, 0, 0)),
                 pl.BlockSpec((1, 1, S), lambda b, l: (b, 0, 0))]
                + [_stacked_spec(p[k]) for k in _ENC_STACKED]
                + [_final_spec(p["final_a"]), _final_spec(p["final_b"])])
    return pl.pallas_call(
        functools.partial(encoder_stack_kernel, num_heads=num_heads),
        out_shape=jax.ShapeDtypeStruct((B, S, D), jnp.float32),
        grid=(B, L),
        in_specs=in_specs,
        out_specs=pl.BlockSpec((1, S, D), lambda b, l: (b, 0, 0)),
        compiler_params=_COMPILER_PARAMS,
    )(*args)


def decoder_forward(tgt, memory, src_bias, tgt_bias, p, *, num_heads):
    B, St, D = tgt.shape
    Ss = memory.shape[1]
    L = p["wqkv"].shape[0]
    args = ([tgt, memory.astype(MM_DTYPE), tgt_bias, src_bias]
            + [p[k] for k in _DEC_STACKED] + [p["final_a"], p["final_b"]])
    in_specs = ([pl.BlockSpec((1, St, D), lambda b, l: (b, 0, 0)),
                 pl.BlockSpec((1, Ss, D), lambda b, l: (b, 0, 0)),
                 pl.BlockSpec((1, St, St), lambda b, l: (b, 0, 0)),
                 pl.BlockSpec((1, 1, Ss), lambda b, l: (b, 0, 0))]
                + [_stacked_spec(p[k]) for k in _DEC_STACKED]
                + [_final_spec(p["final_a"]), _final_spec(p["final_b"])])
    return pl.pallas_call(
        functools.partial(decoder_stack_kernel, num_heads=num_heads),
        out_shape=jax.ShapeDtypeStruct((B, St, D), jnp.float32),
        grid=(B, L),
        in_specs=in_specs,
        out_specs=pl.BlockSpec((1, St, D), lambda b, l: (b, 0, 0)),
        compiler_params=_COMPILER_PARAMS,
    )(*args)


def encoder_decoder_forward(src, tgt, src_mask, tgt_mask, enc_params, dec_params, *, num_heads):
    # masked_fill(mask == 0, -1e9) as an additive bias, computed once in the wrapper.
    src_bias = jnp.where(src_mask == 0.0, NEG_INF, 0.0).astype(jnp.float32)   # (B, 1, Ss)
    tgt_bias = jnp.where(tgt_mask == 0.0, NEG_INF, 0.0).astype(jnp.float32)   # (B, St, St)
    memory = encoder_forward(src, src_bias, enc_params, num_heads=num_heads)
    return decoder_forward(tgt, memory, src_bias, tgt_bias, dec_params, num_heads=num_heads)


# --------------------------------------------------------------------------------------
# pure-JAX reference (same math: bf16 matmul operands, f32 elementwise, exact division)
# --------------------------------------------------------------------------------------
def _ref_layernorm(x, a, b, eps=EPS):
    d = x.shape[-1]
    mean = jnp.mean(x, axis=-1, keepdims=True)
    var = jnp.sum((x - mean) ** 2, axis=-1, keepdims=True) / (d - 1)
    return a * (x - mean) / (jnp.sqrt(var) + eps) + b


def _ref_mm(x, w):
    return jnp.dot(x.astype(MM_DTYPE), w.astype(MM_DTYPE),
                   preferred_element_type=jnp.float32)


def _ref_attention(q, k, v, bias, num_heads):
    B, Sq, D = q.shape
    Sk = k.shape[1]
    dk = D // num_heads
    qh = q.reshape(B, Sq, num_heads, dk).transpose(0, 2, 1, 3)
    kh = k.reshape(B, Sk, num_heads, dk).transpose(0, 2, 1, 3)
    vh = v.reshape(B, Sk, num_heads, dk).transpose(0, 2, 1, 3)
    scores = jnp.einsum("bhqd,bhkd->bhqk", qh.astype(MM_DTYPE), kh.astype(MM_DTYPE),
                        preferred_element_type=jnp.float32) * (1.0 / jnp.sqrt(jnp.float32(dk)))
    scores = scores + bias
    p = jax.nn.softmax(scores, axis=-1)
    ctx = jnp.einsum("bhqk,bhkd->bhqd", p.astype(MM_DTYPE), vh.astype(MM_DTYPE),
                     preferred_element_type=jnp.float32)
    return ctx.transpose(0, 2, 1, 3).reshape(B, Sq, D)


def _ref_encoder(x, src_bias, p, num_heads):
    D = x.shape[-1]
    sb = src_bias[:, None, :, :]
    for l in range(p["wqkv"].shape[0]):
        xn = _ref_layernorm(x, p["ln1_a"][l], p["ln1_b"][l])
        qkv = _ref_mm(xn, p["wqkv"][l]) + p["bqkv"][l]
        q, k, v = qkv[..., :D], qkv[..., D:2 * D], qkv[..., 2 * D:]
        ctx = _ref_attention(q, k, v, sb, num_heads)
        x = x + (_ref_mm(ctx, p["wo"][l]) + p["bo"][l])
        xn2 = _ref_layernorm(x, p["ln2_a"][l], p["ln2_b"][l])
        h = jnp.maximum(_ref_mm(xn2, p["w1"][l]) + p["b1"][l], 0.0)
        x = x + (_ref_mm(h, p["w2"][l]) + p["b2"][l])
    return _ref_layernorm(x, p["final_a"], p["final_b"])


def _ref_decoder(y, memory, src_bias, tgt_bias, p, num_heads):
    D = y.shape[-1]
    sb = src_bias[:, None, :, :]
    tb = tgt_bias[:, None, :, :]
    x = y
    for l in range(p["wqkv"].shape[0]):
        xn = _ref_layernorm(x, p["ln1_a"][l], p["ln1_b"][l])
        qkv = _ref_mm(xn, p["wqkv"][l]) + p["bqkv"][l]
        q, k, v = qkv[..., :D], qkv[..., D:2 * D], qkv[..., 2 * D:]
        ctx = _ref_attention(q, k, v, tb, num_heads)
        x = x + (_ref_mm(ctx, p["wo1"][l]) + p["bo1"][l])

        xn2 = _ref_layernorm(x, p["ln2_a"][l], p["ln2_b"][l])
        qc = _ref_mm(xn2, p["wq"][l]) + p["bq"][l]
        kv = _ref_mm(memory.astype(MM_DTYPE), p["wkv"][l]) + p["bkv"][l]
        kc, vc = kv[..., :D], kv[..., D:]
        ctx2 = _ref_attention(qc, kc, vc, sb, num_heads)
        x = x + (_ref_mm(ctx2, p["wo2"][l]) + p["bo2"][l])

        xn3 = _ref_layernorm(x, p["ln3_a"][l], p["ln3_b"][l])
        h = jnp.maximum(_ref_mm(xn3, p["w1"][l]) + p["b1"][l], 0.0)
        x = x + (_ref_mm(h, p["w2"][l]) + p["b2"][l])
    return _ref_layernorm(x, p["final_a"], p["final_b"])


def ref_forward(src, tgt, src_mask, tgt_mask, enc_params, dec_params, num_heads):
    src_bias = jnp.where(src_mask == 0.0, NEG_INF, 0.0).astype(jnp.float32)
    tgt_bias = jnp.where(tgt_mask == 0.0, NEG_INF, 0.0).astype(jnp.float32)
    memory = _ref_encoder(src, src_bias, enc_params, num_heads)
    return _ref_decoder(tgt, memory, src_bias, tgt_bias, dec_params, num_heads)


# --------------------------------------------------------------------------------------
# deterministic parameter init (weights stacked over layers, matmul weights in bf16)
# --------------------------------------------------------------------------------------
def _nrm(key, shape, dtype=jnp.float32, scale=0.1):
    return (scale * jax.random.normal(key, shape, jnp.float32)).astype(dtype)


def init_encoder_params(key, L, D, d_ff):
    ks = jax.random.split(key, 14)
    return {
        "ln1_a": 1.0 + _nrm(ks[0], (L, 1, D)), "ln1_b": _nrm(ks[1], (L, 1, D)),
        "wqkv": _nrm(ks[2], (L, D, 3 * D), MM_DTYPE), "bqkv": _nrm(ks[3], (L, 1, 3 * D)),
        "wo": _nrm(ks[4], (L, D, D), MM_DTYPE), "bo": _nrm(ks[5], (L, 1, D)),
        "ln2_a": 1.0 + _nrm(ks[6], (L, 1, D)), "ln2_b": _nrm(ks[7], (L, 1, D)),
        "w1": _nrm(ks[8], (L, D, d_ff), MM_DTYPE), "b1": _nrm(ks[9], (L, 1, d_ff)),
        "w2": _nrm(ks[10], (L, d_ff, D), MM_DTYPE), "b2": _nrm(ks[11], (L, 1, D)),
        "final_a": 1.0 + _nrm(ks[12], (1, D)), "final_b": _nrm(ks[13], (1, D)),
    }


def init_decoder_params(key, L, D, d_ff):
    ks = jax.random.split(key, 22)
    return {
        "ln1_a": 1.0 + _nrm(ks[0], (L, 1, D)), "ln1_b": _nrm(ks[1], (L, 1, D)),
        "wqkv": _nrm(ks[2], (L, D, 3 * D), MM_DTYPE), "bqkv": _nrm(ks[3], (L, 1, 3 * D)),
        "wo1": _nrm(ks[4], (L, D, D), MM_DTYPE), "bo1": _nrm(ks[5], (L, 1, D)),
        "ln2_a": 1.0 + _nrm(ks[6], (L, 1, D)), "ln2_b": _nrm(ks[7], (L, 1, D)),
        "wq": _nrm(ks[8], (L, D, D), MM_DTYPE), "bq": _nrm(ks[9], (L, 1, D)),
        "wkv": _nrm(ks[10], (L, D, 2 * D), MM_DTYPE), "bkv": _nrm(ks[11], (L, 1, 2 * D)),
        "wo2": _nrm(ks[12], (L, D, D), MM_DTYPE), "bo2": _nrm(ks[13], (L, 1, D)),
        "ln3_a": 1.0 + _nrm(ks[14], (L, 1, D)), "ln3_b": _nrm(ks[15], (L, 1, D)),
        "w1": _nrm(ks[16], (L, D, d_ff), MM_DTYPE), "b1": _nrm(ks[17], (L, 1, d_ff)),
        "w2": _nrm(ks[18], (L, d_ff, D), MM_DTYPE), "b2": _nrm(ks[19], (L, 1, D)),
        "final_a": 1.0 + _nrm(ks[20], (1, D)), "final_b": _nrm(ks[21], (1, D)),
    }


if __name__ == "__main__":
    B, S_SRC, S_TGT, D, H, D_FF, N_ENC, N_DEC = 2, 8, 6, 32, 4, 64, 2, 2

    key = jax.random.PRNGKey(0)
    k_src, k_tgt, k_enc, k_dec = jax.random.split(key, 4)
    src = jax.random.normal(k_src, (B, S_SRC, D), jnp.float32)   # pre-embedded source
    tgt = jax.random.normal(k_tgt, (B, S_TGT, D), jnp.float32)   # pre-embedded target

    # src padding mask (B, 1, S_src); batch 1 has the last two source positions padded.
    src_mask = jnp.ones((B, 1, S_SRC), jnp.float32).at[1, 0, 6:].set(0.0)
    # tgt mask = pad mask & causal mask -> (B, S_tgt, S_tgt)
    subsequent = jnp.tril(jnp.ones((S_TGT, S_TGT), jnp.float32))
    tgt_pad = jnp.ones((B, 1, S_TGT), jnp.float32).at[1, 0, 5:].set(0.0)
    tgt_mask = tgt_pad * subsequent[None]

    enc_params = init_encoder_params(k_enc, N_ENC, D, D_FF)
    dec_params = init_decoder_params(k_dec, N_DEC, D, D_FF)

    out = encoder_decoder_forward(src, tgt, src_mask, tgt_mask,
                                  enc_params, dec_params, num_heads=H)
    out = jax.block_until_ready(out)

    ref = ref_forward(src, tgt, src_mask, tgt_mask, enc_params, dec_params, H)
    assert out.shape == (B, S_TGT, D)
    max_err = float(jnp.max(jnp.abs(out - ref)))
    # tolerance covers the approximate EUP reciprocals (bf16 matmul rounding is shared
    # with the reference, which mirrors the kernel's matmul dtypes exactly)
    assert bool(jnp.allclose(out, ref, rtol=2e-2, atol=2e-2)), \
        f"mismatch vs JAX reference (max abs err {max_err:.3e})"

    print("KERNEL_OK")
</pallas_src>

<mosaic_0001>
module attributes {stable_mosaic.version = 11 : i64} {
  func.func @encoder_stack_kernel(%arg0: i32, %arg1: i32, %arg2: memref<1x8x32xf32, #tpu.memory_space<vmem>>, %arg3: memref<1x1x8xf32, #tpu.memory_space<vmem>>, %arg4: memref<1x1x32xf32, #tpu.memory_space<vmem>>, %arg5: memref<1x1x32xf32, #tpu.memory_space<vmem>>, %arg6: memref<1x32x96xbf16, #tpu.memory_space<vmem>>, %arg7: memref<1x1x96xf32, #tpu.memory_space<vmem>>, %arg8: memref<1x32x32xbf16, #tpu.memory_space<vmem>>, %arg9: memref<1x1x32xf32, #tpu.memory_space<vmem>>, %arg10: memref<1x1x32xf32, #tpu.memory_space<vmem>>, %arg11: memref<1x1x32xf32, #tpu.memory_space<vmem>>, %arg12: memref<1x32x64xbf16, #tpu.memory_space<vmem>>, %arg13: memref<1x1x64xf32, #tpu.memory_space<vmem>>, %arg14: memref<1x64x32xbf16, #tpu.memory_space<vmem>>, %arg15: memref<1x1x32xf32, #tpu.memory_space<vmem>>, %arg16: memref<1x32xf32, #tpu.memory_space<vmem>>, %arg17: memref<1x32xf32, #tpu.memory_space<vmem>>, %arg18: memref<1x8x32xf32, #tpu.memory_space<vmem>>) attributes {dimension_semantics = [#tpu.dimension_semantics<parallel>, #tpu.dimension_semantics<arbitrary>], iteration_bounds = array<i64: 2, 2>, scalar_prefetch = 0 : i64, scratch_operands = 0 : i64, tpu.core_type = #tpu.core_type<tc>, window_params = [{transform_indices = @transform_0, window_bounds = array<i64: 1, 8, 32>}, {transform_indices = @transform_1, window_bounds = array<i64: 1, 1, 8>}, {transform_indices = @transform_2, window_bounds = array<i64: 1, 1, 32>}, {transform_indices = @transform_3, window_bounds = array<i64: 1, 1, 32>}, {transform_indices = @transform_4, window_bounds = array<i64: 1, 32, 96>}, {transform_indices = @transform_5, window_bounds = array<i64: 1, 1, 96>}, {transform_indices = @transform_6, window_bounds = array<i64: 1, 32, 32>}, {transform_indices = @transform_7, window_bounds = array<i64: 1, 1, 32>}, {transform_indices = @transform_8, window_bounds = array<i64: 1, 1, 32>}, {transform_indices = @transform_9, window_bounds = array<i64: 1, 1, 32>}, {transform_indices = @transform_10, window_bounds = array<i64: 1, 32, 64>}, {transform_indices = @transform_11, window_bounds = array<i64: 1, 1, 64>}, {transform_indices = @transform_12, window_bounds = array<i64: 1, 64, 32>}, {transform_indices = @transform_13, window_bounds = array<i64: 1, 1, 32>}, {pipeline_mode = #tpu.pipeline_mode<synchronous>, transform_indices = @transform_14, window_bounds = array<i64: 1, 32>}, {pipeline_mode = #tpu.pipeline_mode<synchronous>, transform_indices = @transform_15, window_bounds = array<i64: 1, 32>}, {transform_indices = @transform_16, window_bounds = array<i64: 1, 8, 32>}]} {
    %c0_i32 = arith.constant 0 : i32
    %0 = arith.cmpi eq, %arg1, %c0_i32 : i32
    %1 = arith.extui %0 : i1 to i32
    %c0_i32_0 = arith.constant 0 : i32
    %2 = arith.cmpi ne, %1, %c0_i32_0 : i32
    scf.if %2 {
      %c0_66 = arith.constant 0 : index
      %c0_67 = arith.constant 0 : index
      %c0_68 = arith.constant 0 : index
      %137 = vector.load %arg2[%c0_66, %c0_67, %c0_68] : memref<1x8x32xf32, #tpu.memory_space<vmem>>, vector<1x8x32xf32>
      %c0_69 = arith.constant 0 : index
      %c0_70 = arith.constant 0 : index
      %c0_71 = arith.constant 0 : index
      %138 = vector.load %arg18[%c0_69, %c0_70, %c0_71] : memref<1x8x32xf32, #tpu.memory_space<vmem>>, vector<1x8x32xf32>
      tpu.vector_store %arg18[%c0_69, %c0_70, %c0_71], %137 {strides = array<i32>} : memref<1x8x32xf32, #tpu.memory_space<vmem>>, vector<1x8x32xf32>,
    } else {
    }
    %c0 = arith.constant 0 : index
    %c0_1 = arith.constant 0 : index
    %c0_2 = arith.constant 0 : index
    %3 = vector.load %arg18[%c0, %c0_1, %c0_2] : memref<1x8x32xf32, #tpu.memory_space<vmem>>, vector<1x8x32xf32>
    %4 = vector.shape_cast %3 : vector<1x8x32xf32> to vector<8x32xf32>
    %c0_3 = arith.constant 0 : index
    %c0_4 = arith.constant 0 : index
    %c0_5 = arith.constant 0 : index
    %5 = vector.load %arg3[%c0_3, %c0_4, %c0_5] : memref<1x1x8xf32, #tpu.memory_space<vmem>>, vector<1x1x8xf32>
    %6 = vector.shape_cast %5 : vector<1x1x8xf32> to vector<1x8xf32>
    %c0_6 = arith.constant 0 : index
    %c0_7 = arith.constant 0 : index
    %c0_8 = arith.constant 0 : index
    %7 = vector.load %arg4[%c0_6, %c0_7, %c0_8] : memref<1x1x32xf32, #tpu.memory_space<vmem>>, vector<1x1x32xf32>
    %8 = vector.shape_cast %7 : vector<1x1x32xf32> to vector<1x32xf32>
    %c0_9 = arith.constant 0 : index
    %c0_10 = arith.constant 0 : index
    %c0_11 = arith.constant 0 : index
    %9 = vector.load %arg5[%c0_9, %c0_10, %c0_11] : memref<1x1x32xf32, #tpu.memory_space<vmem>>, vector<1x1x32xf32>
    %10 = vector.shape_cast %9 : vector<1x1x32xf32> to vector<1x32xf32>
    %cst = arith.constant dense<0.000000e+00> : vector<8xf32>
    %11 = vector.multi_reduction <add>, %4, %cst [1] : vector<8x32xf32> to vector<8xf32>
    %12 = vector.shape_cast %11 : vector<8xf32> to vector<8x1xf32>
    %cst_12 = arith.constant 3.200000e+01 : f32
    %13 = vector.broadcast %cst_12 : f32 to vector<8x1xf32>
    %14 = arith.divf %12, %13 : vector<8x1xf32>
    %15 = vector.broadcast %14 : vector<8x1xf32> to vector<8x32xf32>
    %16 = arith.subf %4, %15 : vector<8x32xf32>
    %17 = arith.mulf %16, %16 : vector<8x32xf32>
    %cst_13 = arith.constant dense<0.000000e+00> : vector<8xf32>
    %18 = vector.multi_reduction <add>, %17, %cst_13 [1] : vector<8x32xf32> to vector<8xf32>
    %19 = vector.shape_cast %18 : vector<8xf32> to vector<8x1xf32>
    %cst_14 = arith.constant 3.100000e+01 : f32
    %20 = vector.broadcast %cst_14 : f32 to vector<8x1xf32>
    %21 = arith.divf %19, %20 : vector<8x1xf32>
    %22 = math.sqrt %21 : vector<8x1xf32>
    %cst_15 = arith.constant 9.99999997E-7 : f32
    %23 = vector.broadcast %cst_15 : f32 to vector<8x1xf32>
    %24 = arith.addf %22, %23 : vector<8x1xf32>
    %25 = tpu.reciprocal %24 {approx = true} : vector<8x1xf32> -> vector<8x1xf32>
    %26 = vector.broadcast %14 : vector<8x1xf32> to vector<8x32xf32>
    %27 = arith.subf %4, %26 : vector<8x32xf32>
    %28 = vector.broadcast %8 : vector<1x32xf32> to vector<8x32xf32>
    %29 = arith.mulf %28, %27 : vector<8x32xf32>
    %30 = vector.broadcast %25 : vector<8x1xf32> to vector<8x32xf32>
    %31 = arith.mulf %29, %30 : vector<8x32xf32>
    %32 = vector.broadcast %10 : vector<1x32xf32> to vector<8x32xf32>
    %33 = arith.addf %31, %32 : vector<8x32xf32>
    %34 = arith.truncf %33 : vector<8x32xf32> to vector<8x32xbf16>
    %c0_16 = arith.constant 0 : index
    %c0_17 = arith.constant 0 : index
    %c0_18 = arith.constant 0 : index
    %35 = vector.load %arg6[%c0_16, %c0_17, %c0_18] : memref<1x32x96xbf16, #tpu.memory_space<vmem>>, vector<1x32x96xbf16>
    %36 = vector.shape_cast %35 : vector<1x32x96xbf16> to vector<32x96xbf16>
    %cst_19 = arith.constant dense<0.000000e+00> : vector<8x96xf32>
    %37 = tpu.matmul %34, %36, %cst_19 {dimension_numbers = #tpu.dot_dimension_numbers<[1], [0], [0], [1], [0, 0, 1, 1], [], []>} : vector<8x32xbf16>, vector<32x96xbf16>, vector<8x96xf32> -> vector<8x96xf32>
    %c0_20 = arith.constant 0 : index
    %c0_21 = arith.constant 0 : index
    %c0_22 = arith.constant 0 : index
    %38 = vector.load %arg7[%c0_20, %c0_21, %c0_22] : memref<1x1x96xf32, #tpu.memory_space<vmem>>, vector<1x1x96xf32>
    %39 = vector.shape_cast %38 : vector<1x1x96xf32> to vector<1x96xf32>
    %40 = vector.broadcast %39 : vector<1x96xf32> to vector<8x96xf32>
    %41 = arith.addf %37, %40 : vector<8x96xf32>
    %42 = vector.extract_strided_slice %41 {offsets = [0, 0], sizes = [8, 32], strides = [1, 1]} : vector<8x96xf32> to vector<8x32xf32>
    %43 = vector.extract_strided_slice %41 {offsets = [0, 32], sizes = [8, 32], strides = [1, 1]} : vector<8x96xf32> to vector<8x32xf32>
    %44 = vector.extract_strided_slice %41 {offsets = [0, 64], sizes = [8, 32], strides = [1, 1]} : vector<8x96xf32> to vector<8x32xf32>
    %cst_23 = arith.constant 8.000000e+00 : f32
    %45 = math.sqrt %cst_23 : f32
    %cst_24 = arith.constant 1.000000e+00 : f32
    %46 = arith.divf %cst_24, %45 : f32
    %47 = vector.shape_cast %42 : vector<8x32xf32> to vector<8x4x8xf32>
    %48 = tpu.transpose %47, [1, 0, 2] : vector<8x4x8xf32> -> vector<4x8x8xf32>
    %49 = vector.shape_cast %43 : vector<8x32xf32> to vector<8x4x8xf32>
    %50 = tpu.transpose %49, [1, 0, 2] : vector<8x4x8xf32> -> vector<4x8x8xf32>
    %51 = vector.shape_cast %44 : vector<8x32xf32> to vector<8x4x8xf32>
    %52 = tpu.transpose %51, [1, 0, 2] : vector<8x4x8xf32> -> vector<4x8x8xf32>
    %53 = arith.truncf %48 : vector<4x8x8xf32> to vector<4x8x8xbf16>
    %54 = arith.truncf %50 : vector<4x8x8xf32> to vector<4x8x8xbf16>
    "tpu.trace_start"() <{level = 10 : i32, message = "hqd,hkd->hqk"}> : () -> ()
    %cst_25 = arith.constant dense<0.000000e+00> : vector<4x8x8xf32>
    %55 = tpu.matmul %53, %54, %cst_25 {dimension_numbers = #tpu.dot_dimension_numbers<[2], [2], [1], [1], [0, 0, 0, 1, 1, 1], [0], [0]>} : vector<4x8x8xbf16>, vector<4x8x8xbf16>, vector<4x8x8xf32> -> vector<4x8x8xf32>
    "tpu.trace_stop"() : () -> ()
    %56 = vector.broadcast %46 : f32 to vector<4x8x8xf32>
    %57 = arith.mulf %55, %56 : vector<4x8x8xf32>
    %58 = vector.shape_cast %6 : vector<1x8xf32> to vector<1x1x8xf32>
    %59 = vector.broadcast %58 : vector<1x1x8xf32> to vector<4x8x8xf32>
    %60 = arith.addf %57, %59 : vector<4x8x8xf32>
    %cst_26 = arith.constant dense<0xFF800000> : vector<4x8xf32>
    %61 = vector.multi_reduction <maximumf>, %60, %cst_26 [2] : vector<4x8x8xf32> to vector<4x8xf32>
    %62 = vector.shape_cast %61 : vector<4x8xf32> to vector<4x8x1xf32>
    %63 = vector.broadcast %62 : vector<4x8x1xf32> to vector<4x8x8xf32>
    %64 = arith.subf %60, %63 : vector<4x8x8xf32>
    %65 = math.exp %64 : vector<4x8x8xf32>
    %cst_27 = arith.constant dense<0.000000e+00> : vector<4x8xf32>
    %66 = vector.multi_reduction <add>, %65, %cst_27 [2] : vector<4x8x8xf32> to vector<4x8xf32>
    %67 = vector.shape_cast %66 : vector<4x8xf32> to vector<4x8x1xf32>
    %68 = tpu.reciprocal %67 {approx = true} : vector<4x8x1xf32> -> vector<4x8x1xf32>
    %69 = vector.broadcast %68 : vector<4x8x1xf32> to vector<4x8x8xf32>
    %70 = arith.mulf %65, %69 : vector<4x8x8xf32>
    %71 = arith.truncf %70 : vector<4x8x8xf32> to vector<4x8x8xbf16>
    %72 = arith.truncf %52 : vector<4x8x8xf32> to vector<4x8x8xbf16>
    "tpu.trace_start"() <{level = 10 : i32, message = "hqk,hkd->hqd"}> : () -> ()
    %cst_28 = arith.constant dense<0.000000e+00> : vector<4x8x8xf32>
    %73 = tpu.matmul %71, %72, %cst_28 {dimension_numbers = #tpu.dot_dimension_numbers<[2], [1], [1], [2], [0, 0, 0, 1, 1, 2], [0], [0]>} : vector<4x8x8xbf16>, vector<4x8x8xbf16>, vector<4x8x8xf32> -> vector<4x8x8xf32>
    "tpu.trace_stop"() : () -> ()
    %74 = tpu.transpose %73, [1, 0, 2] : vector<4x8x8xf32> -> vector<8x4x8xf32>
    %75 = vector.shape_cast %74 : vector<8x4x8xf32> to vector<8x32xf32>
    %76 = arith.truncf %75 : vector<8x32xf32> to vector<8x32xbf16>
    %c0_29 = arith.constant 0 : index
    %c0_30 = arith.constant 0 : index
    %c0_31 = arith.constant 0 : index
    %77 = vector.load %arg8[%c0_29, %c0_30, %c0_31] : memref<1x32x32xbf16, #tpu.memory_space<vmem>>, vector<1x32x32xbf16>
    %78 = vector.shape_cast %77 : vector<1x32x32xbf16> to vector<32x32xbf16>
    %cst_32 = arith.constant dense<0.000000e+00> : vector<8x32xf32>
    %79 = tpu.matmul %76, %78, %cst_32 {dimension_numbers = #tpu.dot_dimension_numbers<[1], [0], [0], [1], [0, 0, 1, 1], [], []>} : vector<8x32xbf16>, vector<32x32xbf16>, vector<8x32xf32> -> vector<8x32xf32>
    %c0_33 = arith.constant 0 : index
    %c0_34 = arith.constant 0 : index
    %c0_35 = arith.constant 0 : index
    %80 = vector.load %arg9[%c0_33, %c0_34, %c0_35] : memref<1x1x32xf32, #tpu.memory_space<vmem>>, vector<1x1x32xf32>
    %81 = vector.shape_cast %80 : vector<1x1x32xf32> to vector<1x32xf32>
    %82 = vector.broadcast %81 : vector<1x32xf32> to vector<8x32xf32>
    %83 = arith.addf %79, %82 : vector<8x32xf32>
    %84 = arith.addf %4, %83 : vector<8x32xf32>
    %c0_36 = arith.constant 0 : index
    %c0_37 = arith.constant 0 : index
    %c0_38 = arith.constant 0 : index
    %85 = vector.load %arg10[%c0_36, %c0_37, %c0_38] : memref<1x1x32xf32, #tpu.memory_space<vmem>>, vector<1x1x32xf32>
    %86 = vector.shape_cast %85 : vector<1x1x32xf32> to vector<1x32xf32>
    %c0_39 = arith.constant 0 : index
    %c0_40 = arith.constant 0 : index
    %c0_41 = arith.constant 0 : index
    %87 = vector.load %arg11[%c0_39, %c0_40, %c0_41] : memref<1x1x32xf32, #tpu.memory_space<vmem>>, vector<1x1x32xf32>
    %88 = vector.shape_cast %87 : vector<1x1x32xf32> to vector<1x32xf32>
    %cst_42 = arith.constant dense<0.000000e+00> : vector<8xf32>
    %89 = vector.multi_reduction <add>, %84, %cst_42 [1] : vector<8x32xf32> to vector<8xf32>
    %90 = vector.shape_cast %89 : vector<8xf32> to vector<8x1xf32>
    %cst_43 = arith.constant 3.200000e+01 : f32
    %91 = vector.broadcast %cst_43 : f32 to vector<8x1xf32>
    %92 = arith.divf %90, %91 : vector<8x1xf32>
    %93 = vector.broadcast %92 : vector<8x1xf32> to vector<8x32xf32>
    %94 = arith.subf %84, %93 : vector<8x32xf32>
    %95 = arith.mulf %94, %94 : vector<8x32xf32>
    %cst_44 = arith.constant dense<0.000000e+00> : vector<8xf32>
    %96 = vector.multi_reduction <add>, %95, %cst_44 [1] : vector<8x32xf32> to vector<8xf32>
    %97 = vector.shape_cast %96 : vector<8xf32> to vector<8x1xf32>
    %cst_45 = arith.constant 3.100000e+01 : f32
    %98 = vector.broadcast %cst_45 : f32 to vector<8x1xf32>
    %99 = arith.divf %97, %98 : vector<8x1xf32>
    %100 = math.sqrt %99 : vector<8x1xf32>
    %cst_46 = arith.constant 9.99999997E-7 : f32
    %101 = vector.broadcast %cst_46 : f32 to vector<8x1xf32>
    %102 = arith.addf %100, %101 : vector<8x1xf32>
    %103 = tpu.reciprocal %102 {approx = true} : vector<8x1xf32> -> vector<8x1xf32>
    %104 = vector.broadcast %92 : vector<8x1xf32> to vector<8x32xf32>
    %105 = arith.subf %84, %104 : vector<8x32xf32>
    %106 = vector.broadcast %86 : vector<1x32xf32> to vector<8x32xf32>
    %107 = arith.mulf %106, %105 : vector<8x32xf32>
    %108 = vector.broadcast %103 : vector<8x1xf32> to vector<8x32xf32>
    %109 = arith.mulf %107, %108 : vector<8x32xf32>
    %110 = vector.broadcast %88 : vector<1x32xf32> to vector<8x32xf32>
    %111 = arith.addf %109, %110 : vector<8x32xf32>
    %112 = arith.truncf %111 : vector<8x32xf32> to vector<8x32xbf16>
    %c0_47 = arith.constant 0 : index
    %c0_48 = arith.constant 0 : index
    %c0_49 = arith.constant 0 : index
    %113 = vector.load %arg12[%c0_47, %c0_48, %c0_49] : memref<1x32x64xbf16, #tpu.memory_space<vmem>>, vector<1x32x64xbf16>
    %114 = vector.shape_cast %113 : vector<1x32x64xbf16> to vector<32x64xbf16>
    %cst_50 = arith.constant dense<0.000000e+00> : vector<8x64xf32>
    %115 = tpu.matmul %112, %114, %cst_50 {dimension_numbers = #tpu.dot_dimension_numbers<[1], [0], [0], [1], [0, 0, 1, 1], [], []>} : vector<8x32xbf16>, vector<32x64xbf16>, vector<8x64xf32> -> vector<8x64xf32>
    %c0_51 = arith.constant 0 : index
    %c0_52 = arith.constant 0 : index
    %c0_53 = arith.constant 0 : index
    %116 = vector.load %arg13[%c0_51, %c0_52, %c0_53] : memref<1x1x64xf32, #tpu.memory_space<vmem>>, vector<1x1x64xf32>
    %117 = vector.shape_cast %116 : vector<1x1x64xf32> to vector<1x64xf32>
    %118 = vector.broadcast %117 : vector<1x64xf32> to vector<8x64xf32>
    %119 = arith.addf %115, %118 : vector<8x64xf32>
    %cst_54 = arith.constant 0.000000e+00 : f32
    %120 = vector.broadcast %cst_54 : f32 to vector<8x64xf32>
    %121 = arith.maximumf %119, %120 : vector<8x64xf32>
    %122 = arith.truncf %121 : vector<8x64xf32> to vector<8x64xbf16>
    %c0_55 = arith.constant 0 : index
    %c0_56 = arith.constant 0 : index
    %c0_57 = arith.constant 0 : index
    %123 = vector.load %arg14[%c0_55, %c0_56, %c0_57] : memref<1x64x32xbf16, #tpu.memory_space<vmem>>, vector<1x64x32xbf16>
    %124 = vector.shape_cast %123 : vector<1x64x32xbf16> to vector<64x32xbf16>
    %cst_58 = arith.constant dense<0.000000e+00> : vector<8x32xf32>
    %125 = tpu.matmul %122, %124, %cst_58 {dimension_numbers = #tpu.dot_dimension_numbers<[1], [0], [0], [1], [0, 0, 1, 1], [], []>} : vector<8x64xbf16>, vector<64x32xbf16>, vector<8x32xf32> -> vector<8x32xf32>
    %c0_59 = arith.constant 0 : index
    %c0_60 = arith.constant 0 : index
    %c0_61 = arith.constant 0 : index
    %126 = vector.load %arg15[%c0_59, %c0_60, %c0_61] : memref<1x1x32xf32, #tpu.memory_space<vmem>>, vector<1x1x32xf32>
    %127 = vector.shape_cast %126 : vector<1x1x32xf32> to vector<1x32xf32>
    %128 = vector.broadcast %127 : vector<1x32xf32> to vector<8x32xf32>
    %129 = arith.addf %125, %128 : vector<8x32xf32>
    %130 = arith.addf %84, %129 : vector<8x32xf32>
    %c0_62 = arith.constant 0 : index
    %c0_63 = arith.constant 0 : index
    %c0_64 = arith.constant 0 : index
    %131 = vector.load %arg18[%c0_62, %c0_63, %c0_64] : memref<1x8x32xf32, #tpu.memory_space<vmem>>, vector<1x8x32xf32>
    %132 = vector.shape_cast %131 : vector<1x8x32xf32> to vector<8x32xf32>
    %133 = vector.shape_cast %130 : vector<8x32xf32> to vector<1x8x32xf32>
    tpu.vector_store %arg18[%c0_62, %c0_63, %c0_64], %133 {strides = array<i32>} : memref<1x8x32xf32, #tpu.memory_space<vmem>>, vector<1x8x32xf32>,
    %c1_i32 = arith.constant 1 : i32
    %134 = arith.cmpi eq, %arg1, %c1_i32 : i32
    %135 = arith.extui %134 : i1 to i32
    %c0_i32_65 = arith.constant 0 : i32
    %136 = arith.cmpi ne, %135, %c0_i32_65 : i32
    scf.if %136 {
      %c0_66 = arith.constant 0 : index
      %c0_67 = arith.constant 0 : index
      %c0_68 = arith.constant 0 : index
      %137 = vector.load %arg18[%c0_66, %c0_67, %c0_68] : memref<1x8x32xf32, #tpu.memory_space<vmem>>, vector<1x8x32xf32>
      %138 = vector.shape_cast %137 : vector<1x8x32xf32> to vector<8x32xf32>
      %c0_69 = arith.constant 0 : index
      %c0_70 = arith.constant 0 : index
      %139 = vector.load %arg16[%c0_69, %c0_70] : memref<1x32xf32, #tpu.memory_space<vmem>>, vector<1x32xf32>
      %c0_71 = arith.constant 0 : index
      %c0_72 = arith.constant 0 : index
      %140 = vector.load %arg17[%c0_71, %c0_72] : memref<1x32xf32, #tpu.memory_space<vmem>>, vector<1x32xf32>
      %cst_73 = arith.constant dense<0.000000e+00> : vector<8xf32>
      %141 = vector.multi_reduction <add>, %138, %cst_73 [1] : vector<8x32xf32> to vector<8xf32>
      %142 = vector.shape_cast %141 : vector<8xf32> to vector<8x1xf32>
      %cst_74 = arith.constant 3.200000e+01 : f32
      %143 = vector.broadcast %cst_74 : f32 to vector<8x1xf32>
      %144 = arith.divf %142, %143 : vector<8x1xf32>
      %145 = vector.broadcast %144 : vector<8x1xf32> to vector<8x32xf32>
      %146 = arith.subf %138, %145 : vector<8x32xf32>
      %147 = arith.mulf %146, %146 : vector<8x32xf32>
      %cst_75 = arith.constant dense<0.000000e+00> : vector<8xf32>
      %148 = vector.multi_reduction <add>, %147, %cst_75 [1] : vector<8x32xf32> to vector<8xf32>
      %149 = vector.shape_cast %148 : vector<8xf32> to vector<8x1xf32>
      %cst_76 = arith.constant 3.100000e+01 : f32
      %150 = vector.broadcast %cst_76 : f32 to vector<8x1xf32>
      %151 = arith.divf %149, %150 : vector<8x1xf32>
      %152 = math.sqrt %151 : vector<8x1xf32>
      %cst_77 = arith.constant 9.99999997E-7 : f32
      %153 = vector.broadcast %cst_77 : f32 to vector<8x1xf32>
      %154 = arith.addf %152, %153 : vector<8x1xf32>
      %155 = tpu.reciprocal %154 {approx = true} : vector<8x1xf32> -> vector<8x1xf32>
      %156 = vector.broadcast %144 : vector<8x1xf32> to vector<8x32xf32>
      %157 = arith.subf %138, %156 : vector<8x32xf32>
      %158 = vector.broadcast %139 : vector<1x32xf32> to vector<8x32xf32>
      %159 = arith.mulf %158, %157 : vector<8x32xf32>
      %160 = vector.broadcast %155 : vector<8x1xf32> to vector<8x32xf32>
      %161 = arith.mulf %159, %160 : vector<8x32xf32>
      %162 = vector.broadcast %140 : vector<1x32xf32> to vector<8x32xf32>
      %163 = arith.addf %161, %162 : vector<8x32xf32>
      %c0_78 = arith.constant 0 : index
      %c0_79 = arith.constant 0 : index
      %c0_80 = arith.constant 0 : index
      %164 = vector.load %arg18[%c0_78, %c0_79, %c0_80] : memref<1x8x32xf32, #tpu.memory_space<vmem>>, vector<1x8x32xf32>
      %165 = vector.shape_cast %164 : vector<1x8x32xf32> to vector<8x32xf32>
      %166 = vector.shape_cast %163 : vector<8x32xf32> to vector<1x8x32xf32>
      tpu.vector_store %arg18[%c0_78, %c0_79, %c0_80], %166 {strides = array<i32>} : memref<1x8x32xf32, #tpu.memory_space<vmem>>, vector<1x8x32xf32>,
    } else {
    }
    return
  }
  func.func @transform_0(%arg0: i32, %arg1: i32) -> (i32, i32, i32) {
    %c0_i32 = arith.constant 0 : i32
    %c0_i32_0 = arith.constant 0 : i32
    %c0_i32_1 = arith.constant 0 : i32
    return %arg0, %c0_i32, %c0_i32_0 : i32, i32, i32
  }
  func.func @transform_1(%arg0: i32, %arg1: i32) -> (i32, i32, i32) {
    %c0_i32 = arith.constant 0 : i32
    %c0_i32_0 = arith.constant 0 : i32
    %c0_i32_1 = arith.constant 0 : i32
    return %arg0, %c0_i32, %c0_i32_0 : i32, i32, i32
  }
  func.func @transform_2(%arg0: i32, %arg1: i32) -> (i32, i32, i32) {
    %c0_i32 = arith.constant 0 : i32
    %c0_i32_0 = arith.constant 0 : i32
    %c0_i32_1 = arith.constant 0 : i32
    return %arg1, %c0_i32, %c0_i32_0 : i32, i32, i32
  }
  func.func @transform_3(%arg0: i32, %arg1: i32) -> (i32, i32, i32) {
    %c0_i32 = arith.constant 0 : i32
    %c0_i32_0 = arith.constant 0 : i32
    %c0_i32_1 = arith.constant 0 : i32
    return %arg1, %c0_i32, %c0_i32_0 : i32, i32, i32
  }
  func.func @transform_4(%arg0: i32, %arg1: i32) -> (i32, i32, i32) {
    %c0_i32 = arith.constant 0 : i32
    %c0_i32_0 = arith.constant 0 : i32
    %c0_i32_1 = arith.constant 0 : i32
    return %arg1, %c0_i32, %c0_i32_0 : i32, i32, i32
  }
  func.func @transform_5(%arg0: i32, %arg1: i32) -> (i32, i32, i32) {
    %c0_i32 = arith.constant 0 : i32
    %c0_i32_0 = arith.constant 0 : i32
    %c0_i32_1 = arith.constant 0 : i32
    return %arg1, %c0_i32, %c0_i32_0 : i32, i32, i32
  }
  func.func @transform_6(%arg0: i32, %arg1: i32) -> (i32, i32, i32) {
    %c0_i32 = arith.constant 0 : i32
    %c0_i32_0 = arith.constant 0 : i32
    %c0_i32_1 = arith.constant 0 : i32
    return %arg1, %c0_i32, %c0_i32_0 : i32, i32, i32
  }
  func.func @transform_7(%arg0: i32, %arg1: i32) -> (i32, i32, i32) {
    %c0_i32 = arith.constant 0 : i32
    %c0_i32_0 = arith.constant 0 : i32
    %c0_i32_1 = arith.constant 0 : i32
    return %arg1, %c0_i32, %c0_i32_0 : i32, i32, i32
  }
  func.func @transform_8(%arg0: i32, %arg1: i32) -> (i32, i32, i32) {
    %c0_i32 = arith.constant 0 : i32
    %c0_i32_0 = arith.constant 0 : i32
    %c0_i32_1 = arith.constant 0 : i32
    return %arg1, %c0_i32, %c0_i32_0 : i32, i32, i32
  }
  func.func @transform_9(%arg0: i32, %arg1: i32) -> (i32, i32, i32) {
    %c0_i32 = arith.constant 0 : i32
    %c0_i32_0 = arith.constant 0 : i32
    %c0_i32_1 = arith.constant 0 : i32
    return %arg1, %c0_i32, %c0_i32_0 : i32, i32, i32
  }
  func.func @transform_10(%arg0: i32, %arg1: i32) -> (i32, i32, i32) {
    %c0_i32 = arith.constant 0 : i32
    %c0_i32_0 = arith.constant 0 : i32
    %c0_i32_1 = arith.constant 0 : i32
    return %arg1, %c0_i32, %c0_i32_0 : i32, i32, i32
  }
  func.func @transform_11(%arg0: i32, %arg1: i32) -> (i32, i32, i32) {
    %c0_i32 = arith.constant 0 : i32
    %c0_i32_0 = arith.constant 0 : i32
    %c0_i32_1 = arith.constant 0 : i32
    return %arg1, %c0_i32, %c0_i32_0 : i32, i32, i32
  }
  func.func @transform_12(%arg0: i32, %arg1: i32) -> (i32, i32, i32) {
    %c0_i32 = arith.constant 0 : i32
    %c0_i32_0 = arith.constant 0 : i32
    %c0_i32_1 = arith.constant 0 : i32
    return %arg1, %c0_i32, %c0_i32_0 : i32, i32, i32
  }
  func.func @transform_13(%arg0: i32, %arg1: i32) -> (i32, i32, i32) {
    %c0_i32 = arith.constant 0 : i32
    %c0_i32_0 = arith.constant 0 : i32
    %c0_i32_1 = arith.constant 0 : i32
    return %arg1, %c0_i32, %c0_i32_0 : i32, i32, i32
  }
  func.func @transform_14(%arg0: i32, %arg1: i32) -> (i32, i32) {
    %c0_i32 = arith.constant 0 : i32
    %c0_i32_0 = arith.constant 0 : i32
    %c0_i32_1 = arith.constant 0 : i32
    return %c0_i32, %c0_i32_0 : i32, i32
  }
  func.func @transform_15(%arg0: i32, %arg1: i32) -> (i32, i32) {
    %c0_i32 = arith.constant 0 : i32
    %c0_i32_0 = arith.constant 0 : i32
    %c0_i32_1 = arith.constant 0 : i32
    return %c0_i32, %c0_i32_0 : i32, i32
  }
  func.func @transform_16(%arg0: i32, %arg1: i32) -> (i32, i32, i32) {
    %c0_i32 = arith.constant 0 : i32
    %c0_i32_0 = arith.constant 0 : i32
    %c0_i32_1 = arith.constant 0 : i32
    return %arg0, %c0_i32, %c0_i32_0 : i32, i32, i32
  }
}

</mosaic_0001>

<llo_original>
// kernel: tpu_custom_call.1
$region0: #{tpu_custom_call.1}
  #allocation0 [shape = 'u32[]', space=smem, size = 0x4, offset = 0x4, fixed_abs, tag = 'smem constant byte address 0x4 - core index']
  #allocation1 [shape = 'u32[144,128]{1,0:T(1,128)}', space=vmem, size = 0x12000, scoped, tag = 'internal scratch']
  %s0 = inlined_call_operand.hbm [shape: f32[2,8,32], index: 0, kind: input, shape index: {}]
  %s1 = inlined_call_operand.vmem [shape: f32[2,1,8], index: 1, kind: input, shape index: {}]
  %s2 = inlined_call_operand.vmem [shape: f32[2,1,32], index: 2, kind: input, shape index: {}]
  %s3 = inlined_call_operand.vmem [shape: f32[2,1,32], index: 3, kind: input, shape index: {}]
  %s4 = inlined_call_operand.vmem [shape: bf16[2,32,96], index: 4, kind: input, shape index: {}]
  %s5 = inlined_call_operand.vmem [shape: f32[2,1,96], index: 5, kind: input, shape index: {}]
  %s6 = inlined_call_operand.vmem [shape: bf16[2,32,32], index: 6, kind: input, shape index: {}]
  %s7 = inlined_call_operand.vmem [shape: f32[2,1,32], index: 7, kind: input, shape index: {}]
  %s8 = inlined_call_operand.vmem [shape: f32[2,1,32], index: 8, kind: input, shape index: {}]
  %s9 = inlined_call_operand.hbm [shape: f32[2,1,32], index: 9, kind: input, shape index: {}]
  %s10 = inlined_call_operand.vmem [shape: bf16[2,32,64], index: 10, kind: input, shape index: {}]
  %s11 = inlined_call_operand.hbm [shape: f32[2,1,64], index: 11, kind: input, shape index: {}]
  %s12 = inlined_call_operand.vmem [shape: bf16[2,64,32], index: 12, kind: input, shape index: {}]
  %s13 = inlined_call_operand.vmem [shape: f32[2,1,32], index: 13, kind: input, shape index: {}]
  %s14 = inlined_call_operand.vmem [shape: f32[1,32], index: 14, kind: input, shape index: {}]
  %s15 = inlined_call_operand.vmem [shape: f32[1,32], index: 15, kind: input, shape index: {}]
  %s16 = inlined_call_operand.hbm [shape: f32[2,8,32], index: 16, kind: output, shape index: {}]
  %s17 = sld [smem:[#allocation0]]
  $region117: #{tpu_custom_call.1} parent=0
    _
  %s19 = ssub.s32 1, %s17
  %s20 = scalar_select 0, %s19, %s17
  $region1: #{tpu_custom_call.1} parent=0
    #allocation2 [shape = 'u8[8192]{0}', space=vmem, size = 0x2000, scoped, tag = 'input window, operand 0']
    #allocation3 [shape = 's32[2]{0}', space=sflag, size = 0x8, scoped, tag = 'scoped memory for tpu_custom_call.1']
    #allocation4 [shape = 's32[2]{0}', space=sflag, size = 0x8, scoped, tag = 'scoped memory for tpu_custom_call.1']
    #allocation5 [shape = 'u8[1024]{0}', space=vmem, size = 0x400, scoped, tag = 'input window, operand 9']
    #allocation6 [shape = 's32[2]{0}', space=sflag, size = 0x8, scoped, tag = 'scoped memory for tpu_custom_call.1']
    #allocation7 [shape = 'u8[1024]{0}', space=vmem, size = 0x400, scoped, tag = 'input window, operand 11']
    #allocation8 [shape = 'u8[8192]{0}', space=vmem, size = 0x2000, scoped, tag = 'output window, operand 0']
    %21 = vsyncpa [#allocation3], 0
    %s22 = scalar_lea.sflag [#allocation3], 1
    %23 = vsyncpa %s22, 0
    %24 = vsyncpa [#allocation6], 0
    %s25 = scalar_lea.sflag [#allocation6], 1
    %26 = vsyncpa %s25, 0
    %27 = vsyncpa [#allocation4], 0
    %s28 = scalar_lea.sflag [#allocation4], 1
    %29 = vsyncpa %s28, 0
    loop: start=0, step=1, limit=6
    $region2: #{tpu_custom_call.1} parent=1 // loop_pre_header
      _
    $region3: #{tpu_custom_call.1} parent=1 // loop_header
      %s31 = sphi 0, %s35
      %p32 = scmp.ge.s32.totalorder %s31, 6
      %s38 = sphi 0, %s50
      %s39 = sphi 0, %s46
      %s40 = sphi 0, %s38
      %s41 = sphi 0, %s39
      %s42 = sphi 0, %s40
      %s43 = sphi 0, %s41
      %s53 = sphi 0, %s55
      %s56 = sphi 0, %s53
      %s57 = sphi 0, %s56
      %s73 = sphi 0, %s57
      %s79 = sphi 0, %s81
      %s82 = sphi 0, %s79
      %s83 = sphi 0, %s82
      %s99 = sphi 0, %s83
      %s105 = sphi 0, %s107
      %s108 = sphi 0, %s105
      %s109 = sphi 0, %s108
      %s125 = sphi 0, %s109
      %s131 = sphi 0, %s133
      %s134 = sphi 0, %s131
      %s135 = sphi 0, %s134
      %s151 = sphi 0, %s135
      %s157 = sphi 0, %s159
      %s160 = sphi 0, %s157
      %s161 = sphi 0, %s160
      %s177 = sphi 0, %s161
      %s183 = sphi 0, %s185
      %s186 = sphi 0, %s183
      %s187 = sphi 0, %s186
      %s203 = sphi 0, %s187
      %s209 = sphi 0, %s211
      %s212 = sphi 0, %s209
      %s213 = sphi 0, %s212
      %s229 = sphi 0, %s213
      %s235 = sphi 0, %s237
      %s238 = sphi 0, %s235
      %s239 = sphi 0, %s238
      %s255 = sphi 0, %s239
      %s261 = sphi 0, %s263
      %s264 = sphi 0, %s261
      %s265 = sphi 0, %s264
      %s281 = sphi 0, %s265
      %s287 = sphi 0, %s289
      %s290 = sphi 0, %s287
      %s291 = sphi 0, %s290
      %s307 = sphi 0, %s291
      %s313 = sphi 0, %s315
      %s316 = sphi 0, %s313
      %s317 = sphi 0, %s316
      %s333 = sphi 0, %s317
      %s339 = sphi 0, %s341
      %s342 = sphi 0, %s339
      %s343 = sphi 0, %s342
      %s359 = sphi 0, %s343
      %s365 = sphi 0, %s367
      %s368 = sphi 0, %s365
      %s369 = sphi 0, %s368
      %s385 = sphi 0, %s369
      %s391 = sphi 0, %s393
      %s394 = sphi 0, %s391
      %s395 = sphi 0, %s394
      %s411 = sphi 0, %s395
      %s415 = sphi 0, %s415
      %s417 = sphi 0, %s415
      %s418 = sphi 0, %s417
      %s432 = sphi 0, %s418
      %s436 = sphi 0, %s436
      %s438 = sphi 0, %s436
      %s439 = sphi 0, %s438
      %s453 = sphi 0, %s439
      %s459 = sphi 0, %s461
      %s462 = sphi 0, %s459
      %s463 = sphi 0, %s462
      %s479 = sphi 0, %s463
    $region4: #{tpu_custom_call.1} parent=1 // loop_header_branch
      %34 = sbr.rel (%p32) target = $region8
    $region5: #{tpu_custom_call.1} parent=1 // loop_body
      %s36 = ssub.s32 %s31, 1
      %s37 = ssub.s32 %s31, 2
      %s44 = sadd.s32 1, %s39
      %p45 = scmp.ge.s32.totalorder %s44, 2
      %s46 = scalar_select %p45, 0, %s44
      %s47 = sadd.s32 1, %s38
      %s48 = scalar_select %p45, %s47, %s38
      %p49 = scmp.ge.s32.totalorder %s48, 2
      %s50 = scalar_select %p49, 0, %s48
      %s51 = ssub.s32 %s38, %s50
      %p52 = scmp.eq.s32.totalorder %s51, 0
      %s54 = sadd.s32 %s53, 1
      %s55 = scalar_select %p52, %s53, %s54
      %p58 = pneg %p52
      %p59 = scmp.eq.s32.totalorder %s31, 3
      %p60 = por %p58, %p59
      %p61 = scmp.ne.s32.totalorder %s53, %s56
      %p62 = scmp.eq.s32.totalorder %s31, 0
      %p63 = por %p61, %p62
      %p64 = scmp.ne.s32.totalorder %s53, %s56
      %p65 = scmp.eq.s32.totalorder %s36, 3
      %p66 = por %p64, %p65
      %p67 = scmp.ne.s32.totalorder %s56, %s57
      %p68 = scmp.eq.s32.totalorder %s36, 0
      %p69 = por %p67, %p68
      %p70 = scmp.ne.s32.totalorder %s56, %s57
      %p71 = scmp.eq.s32.totalorder %s37, 3
      %p72 = por %p70, %p71
      %p74 = scmp.ne.s32.totalorder %s57, %s73
      %p75 = scmp.eq.s32.totalorder %s37, 0
      %p76 = por %p74, %p75
      %s77 = ssub.s32 %s38, %s50
      %p78 = scmp.eq.s32.totalorder %s77, 0
      %s80 = sadd.s32 %s79, 1
      %s81 = scalar_select %p78, %s79, %s80
      %p84 = pneg %p78
      %p85 = scmp.eq.s32.totalorder %s31, 3
      %p86 = por %p84, %p85
      %p87 = scmp.ne.s32.totalorder %s79, %s82
      %p88 = scmp.eq.s32.totalorder %s31, 0
      %p89 = por %p87, %p88
      %p90 = scmp.ne.s32.totalorder %s79, %s82
      %p91 = scmp.eq.s32.totalorder %s36, 3
      %p92 = por %p90, %p91
      %p93 = scmp.ne.s32.totalorder %s82, %s83
      %p94 = scmp.eq.s32.totalorder %s36, 0
      %p95 = por %p93, %p94
      %p96 = scmp.ne.s32.totalorder %s82, %s83
      %p97 = scmp.eq.s32.totalorder %s37, 3
      %p98 = por %p96, %p97
      %p100 = scmp.ne.s32.totalorder %s83, %s99
      %p101 = scmp.eq.s32.totalorder %s37, 0
      %p102 = por %p100, %p101
      %s103 = ssub.s32 %s39, %s46
      %p104 = scmp.eq.s32.totalorder %s103, 0
      %s106 = sadd.s32 %s105, 1
      %s107 = scalar_select %p104, %s105, %s106
      %p110 = pneg %p104
      %p111 = scmp.eq.s32.totalorder %s31, 3
      %p112 = por %p110, %p111
      %p113 = scmp.ne.s32.totalorder %s105, %s108
      %p114 = scmp.eq.s32.totalorder %s31, 0
      %p115 = por %p113, %p114
      %p116 = scmp.ne.s32.totalorder %s105, %s108
      %p117 = scmp.eq.s32.totalorder %s36, 3
      %p118 = por %p116, %p117
      %p119 = scmp.ne.s32.totalorder %s108, %s109
      %p120 = scmp.eq.s32.totalorder %s36, 0
      %p121 = por %p119, %p120
      %p122 = scmp.ne.s32.totalorder %s108, %s109
      %p123 = scmp.eq.s32.totalorder %s37, 3
      %p124 = por %p122, %p123
      %p126 = scmp.ne.s32.totalorder %s109, %s125
      %p127 = scmp.eq.s32.totalorder %s37, 0
      %p128 = por %p126, %p127
      %s129 = ssub.s32 %s39, %s46
      %p130 = scmp.eq.s32.totalorder %s129, 0
      %s132 = sadd.s32 %s131, 1
      %s133 = scalar_select %p130, %s131, %s132
      %p136 = pneg %p130
      %p137 = scmp.eq.s32.totalorder %s31, 3
      %p138 = por %p136, %p137
      %p139 = scmp.ne.s32.totalorder %s131, %s134
      %p140 = scmp.eq.s32.totalorder %s31, 0
      %p141 = por %p139, %p140
      %p142 = scmp.ne.s32.totalorder %s131, %s134
      %p143 = scmp.eq.s32.totalorder %s36, 3
      %p144 = por %p142, %p143
      %p145 = scmp.ne.s32.totalorder %s134, %s135
      %p146 = scmp.eq.s32.totalorder %s36, 0
      %p147 = por %p145, %p146
      %p148 = scmp.ne.s32.totalorder %s134, %s135
      %p149 = scmp.eq.s32.totalorder %s37, 3
      %p150 = por %p148, %p149
      %p152 = scmp.ne.s32.totalorder %s135, %s151
      %p153 = scmp.eq.s32.totalorder %s37, 0
      %p154 = por %p152, %p153
      %s155 = ssub.s32 %s39, %s46
      %p156 = scmp.eq.s32.totalorder %s155, 0
      %s158 = sadd.s32 %s157, 1
      %s159 = scalar_select %p156, %s157, %s158
      %p162 = pneg %p156
      %p163 = scmp.eq.s32.totalorder %s31, 3
      %p164 = por %p162, %p163
      %p165 = scmp.ne.s32.totalorder %s157, %s160
      %p166 = scmp.eq.s32.totalorder %s31, 0
      %p167 = por %p165, %p166
      %p168 = scmp.ne.s32.totalorder %s157, %s160
      %p169 = scmp.eq.s32.totalorder %s36, 3
      %p170 = por %p168, %p169
      %p171 = scmp.ne.s32.totalorder %s160, %s161
      %p172 = scmp.eq.s32.totalorder %s36, 0
      %p173 = por %p171, %p172
      %p174 = scmp.ne.s32.totalorder %s160, %s161
      %p175 = scmp.eq.s32.totalorder %s37, 3
      %p176 = por %p174, %p175
      %p178 = scmp.ne.s32.totalorder %s161, %s177
      %p179 = scmp.eq.s32.totalorder %s37, 0
      %p180 = por %p178, %p179
      %s181 = ssub.s32 %s39, %s46
      %p182 = scmp.eq.s32.totalorder %s181, 0
      %s184 = sadd.s32 %s183, 1
      %s185 = scalar_select %p182, %s183, %s184
      %p188 = pneg %p182
      %p189 = scmp.eq.s32.totalorder %s31, 3
      %p190 = por %p188, %p189
      %p191 = scmp.ne.s32.totalorder %s183, %s186
      %p192 = scmp.eq.s32.totalorder %s31, 0
      %p193 = por %p191, %p192
      %p194 = scmp.ne.s32.totalorder %s183, %s186
      %p195 = scmp.eq.s32.totalorder %s36, 3
      %p196 = por %p194, %p195
      %p197 = scmp.ne.s32.totalorder %s186, %s187
      %p198 = scmp.eq.s32.totalorder %s36, 0
      %p199 = por %p197, %p198
      %p200 = scmp.ne.s32.totalorder %s186, %s187
      %p201 = scmp.eq.s32.totalorder %s37, 3
      %p202 = por %p200, %p201
      %p204 = scmp.ne.s32.totalorder %s187, %s203
      %p205 = scmp.eq.s32.totalorder %s37, 0
      %p206 = por %p204, %p205
      %s207 = ssub.s32 %s39, %s46
      %p208 = scmp.eq.s32.totalorder %s207, 0
      %s210 = sadd.s32 %s209, 1
      %s211 = scalar_select %p208, %s209, %s210
      %p214 = pneg %p208
      %p215 = scmp.eq.s32.totalorder %s31, 3
      %p216 = por %p214, %p215
      %p217 = scmp.ne.s32.totalorder %s209, %s212
      %p218 = scmp.eq.s32.totalorder %s31, 0
      %p219 = por %p217, %p218
      %p220 = scmp.ne.s32.totalorder %s209, %s212
      %p221 = scmp.eq.s32.totalorder %s36, 3
      %p222 = por %p220, %p221
      %p223 = scmp.ne.s32.totalorder %s212, %s213
      %p224 = scmp.eq.s32.totalorder %s36, 0
      %p225 = por %p223, %p224
      %p226 = scmp.ne.s32.totalorder %s212, %s213
      %p227 = scmp.eq.s32.totalorder %s37, 3
      %p228 = por %p226, %p227
      %p230 = scmp.ne.s32.totalorder %s213, %s229
      %p231 = scmp.eq.s32.totalorder %s37, 0
      %p232 = por %p230, %p231
      %s233 = ssub.s32 %s39, %s46
      %p234 = scmp.eq.s32.totalorder %s233, 0
      %s236 = sadd.s32 %s235, 1
      %s237 = scalar_select %p234, %s235, %s236
      %p240 = pneg %p234
      %p241 = scmp.eq.s32.totalorder %s31, 3
      %p242 = por %p240, %p241
      %p243 = scmp.ne.s32.totalorder %s235, %s238
      %p244 = scmp.eq.s32.totalorder %s31, 0
      %p245 = por %p243, %p244
      %p246 = scmp.ne.s32.totalorder %s235, %s238
      %p247 = scmp.eq.s32.totalorder %s36, 3
      %p248 = por %p246, %p247
      %p249 = scmp.ne.s32.totalorder %s238, %s239
      %p250 = scmp.eq.s32.totalorder %s36, 0
      %p251 = por %p249, %p250
      %p252 = scmp.ne.s32.totalorder %s238, %s239
      %p253 = scmp.eq.s32.totalorder %s37, 3
      %p254 = por %p252, %p253
      %p256 = scmp.ne.s32.totalorder %s239, %s255
      %p257 = scmp.eq.s32.totalorder %s37, 0
      %p258 = por %p256, %p257
      %s259 = ssub.s32 %s39, %s46
      %p260 = scmp.eq.s32.totalorder %s259, 0
      %s262 = sadd.s32 %s261, 1
      %s263 = scalar_select %p260, %s261, %s262
      %p266 = pneg %p260
      %p267 = scmp.eq.s32.totalorder %s31, 3
      %p268 = por %p266, %p267
      %p269 = scmp.ne.s32.totalorder %s261, %s264
      %p270 = scmp.eq.s32.totalorder %s31, 0
      %p271 = por %p269, %p270
      %p272 = scmp.ne.s32.totalorder %s261, %s264
      %p273 = scmp.eq.s32.totalorder %s36, 3
      %p274 = por %p272, %p273
      %p275 = scmp.ne.s32.totalorder %s264, %s265
      %p276 = scmp.eq.s32.totalorder %s36, 0
      %p277 = por %p275, %p276
      %p278 = scmp.ne.s32.totalorder %s264, %s265
      %p279 = scmp.eq.s32.totalorder %s37, 3
      %p280 = por %p278, %p279
      %p282 = scmp.ne.s32.totalorder %s265, %s281
      %p283 = scmp.eq.s32.totalorder %s37, 0
      %p284 = por %p282, %p283
      %s285 = ssub.s32 %s39, %s46
      %p286 = scmp.eq.s32.totalorder %s285, 0
      %s288 = sadd.s32 %s287, 1
      %s289 = scalar_select %p286, %s287, %s288
      %p292 = pneg %p286
      %p293 = scmp.eq.s32.totalorder %s31, 3
      %p294 = por %p292, %p293
      %p295 = scmp.ne.s32.totalorder %s287, %s290
      %p296 = scmp.eq.s32.totalorder %s31, 0
      %p297 = por %p295, %p296
      %p298 = scmp.ne.s32.totalorder %s287, %s290
      %p299 = scmp.eq.s32.totalorder %s36, 3
      %p300 = por %p298, %p299
      %p301 = scmp.ne.s32.totalorder %s290, %s291
      %p302 = scmp.eq.s32.totalorder %s36, 0
      %p303 = por %p301, %p302
      %p304 = scmp.ne.s32.totalorder %s290, %s291
      %p305 = scmp.eq.s32.totalorder %s37, 3
      %p306 = por %p304, %p305
      %p308 = scmp.ne.s32.totalorder %s291, %s307
      %p309 = scmp.eq.s32.totalorder %s37, 0
      %p310 = por %p308, %p309
      %s311 = ssub.s32 %s39, %s46
      %p312 = scmp.eq.s32.totalorder %s311, 0
      %s314 = sadd.s32 %s313, 1
      %s315 = scalar_select %p312, %s313, %s314
      %p318 = pneg %p312
      %p319 = scmp.eq.s32.totalorder %s31, 3
      %p320 = por %p318, %p319
      %p321 = scmp.ne.s32.totalorder %s313, %s316
      %p322 = scmp.eq.s32.totalorder %s31, 0
      %p323 = por %p321, %p322
      %p324 = scmp.ne.s32.totalorder %s313, %s316
      %p325 = scmp.eq.s32.totalorder %s36, 3
      %p326 = por %p324, %p325
      %p327 = scmp.ne.s32.totalorder %s316, %s317
      %p328 = scmp.eq.s32.totalorder %s36, 0
      %p329 = por %p327, %p328
      %p330 = scmp.ne.s32.totalorder %s316, %s317
      %p331 = scmp.eq.s32.totalorder %s37, 3
      %p332 = por %p330, %p331
      %p334 = scmp.ne.s32.totalorder %s317, %s333
      %p335 = scmp.eq.s32.totalorder %s37, 0
      %p336 = por %p334, %p335
      %s337 = ssub.s32 %s39, %s46
      %p338 = scmp.eq.s32.totalorder %s337, 0
      %s340 = sadd.s32 %s339, 1
      %s341 = scalar_select %p338, %s339, %s340
      %p344 = pneg %p338
      %p345 = scmp.eq.s32.totalorder %s31, 3
      %p346 = por %p344, %p345
      %p347 = scmp.ne.s32.totalorder %s339, %s342
      %p348 = scmp.eq.s32.totalorder %s31, 0
      %p349 = por %p347, %p348
      %p350 = scmp.ne.s32.totalorder %s339, %s342
      %p351 = scmp.eq.s32.totalorder %s36, 3
      %p352 = por %p350, %p351
      %p353 = scmp.ne.s32.totalorder %s342, %s343
      %p354 = scmp.eq.s32.totalorder %s36, 0
      %p355 = por %p353, %p354
      %p356 = scmp.ne.s32.totalorder %s342, %s343
      %p357 = scmp.eq.s32.totalorder %s37, 3
      %p358 = por %p356, %p357
      %p360 = scmp.ne.s32.totalorder %s343, %s359
      %p361 = scmp.eq.s32.totalorder %s37, 0
      %p362 = por %p360, %p361
      %s363 = ssub.s32 %s39, %s46
      %p364 = scmp.eq.s32.totalorder %s363, 0
      %s366 = sadd.s32 %s365, 1
      %s367 = scalar_select %p364, %s365, %s366
      %p370 = pneg %p364
      %p371 = scmp.eq.s32.totalorder %s31, 3
      %p372 = por %p370, %p371
      %p373 = scmp.ne.s32.totalorder %s365, %s368
      %p374 = scmp.eq.s32.totalorder %s31, 0
      %p375 = por %p373, %p374
      %p376 = scmp.ne.s32.totalorder %s365, %s368
      %p377 = scmp.eq.s32.totalorder %s36, 3
      %p378 = por %p376, %p377
      %p379 = scmp.ne.s32.totalorder %s368, %s369
      %p380 = scmp.eq.s32.totalorder %s36, 0
      %p381 = por %p379, %p380
      %p382 = scmp.ne.s32.totalorder %s368, %s369
      %p383 = scmp.eq.s32.totalorder %s37, 3
      %p384 = por %p382, %p383
      %p386 = scmp.ne.s32.totalorder %s369, %s385
      %p387 = scmp.eq.s32.totalorder %s37, 0
      %p388 = por %p386, %p387
      %s389 = ssub.s32 %s39, %s46
      %p390 = scmp.eq.s32.totalorder %s389, 0
      %s392 = sadd.s32 %s391, 1
      %s393 = scalar_select %p390, %s391, %s392
      %p396 = pneg %p390
      %p397 = scmp.eq.s32.totalorder %s31, 3
      %p398 = por %p396, %p397
      %p399 = scmp.ne.s32.totalorder %s391, %s394
      %p400 = scmp.eq.s32.totalorder %s31, 0
      %p401 = por %p399, %p400
      %p402 = scmp.ne.s32.totalorder %s391, %s394
      %p403 = scmp.eq.s32.totalorder %s36, 3
      %p404 = por %p402, %p403
      %p405 = scmp.ne.s32.totalorder %s394, %s395
      %p406 = scmp.eq.s32.totalorder %s36, 0
      %p407 = por %p405, %p406
      %p408 = scmp.ne.s32.totalorder %s394, %s395
      %p409 = scmp.eq.s32.totalorder %s37, 3
      %p410 = por %p408, %p409
      %p412 = scmp.ne.s32.totalorder %s395, %s411
      %p413 = scmp.eq.s32.totalorder %s37, 0
      %p414 = por %p412, %p413
      %s416 = sadd.s32 %s415, 1
      %p419 = scmp.eq.s32.totalorder %s31, 3
      %p420 = scmp.ne.s32.totalorder %s415, %s417
      %p421 = scmp.eq.s32.totalorder %s31, 0
      %p422 = por %p420, %p421
      %p423 = scmp.ne.s32.totalorder %s415, %s417
      %p424 = scmp.eq.s32.totalorder %s36, 3
      %p425 = por %p423, %p424
      %p426 = scmp.ne.s32.totalorder %s417, %s418
      %p427 = scmp.eq.s32.totalorder %s36, 0
      %p428 = por %p426, %p427
      %p429 = scmp.ne.s32.totalorder %s417, %s418
      %p430 = scmp.eq.s32.totalorder %s37, 3
      %p431 = por %p429, %p430
      %p433 = scmp.ne.s32.totalorder %s418, %s432
      %p434 = scmp.eq.s32.totalorder %s37, 0
      %p435 = por %p433, %p434
      %s437 = sadd.s32 %s436, 1
      %p440 = scmp.eq.s32.totalorder %s31, 3
      %p441 = scmp.ne.s32.totalorder %s436, %s438
      %p442 = scmp.eq.s32.totalorder %s31, 0
      %p443 = por %p441, %p442
      %p444 = scmp.ne.s32.totalorder %s436, %s438
      %p445 = scmp.eq.s32.totalorder %s36, 3
      %p446 = por %p444, %p445
      %p447 = scmp.ne.s32.totalorder %s438, %s439
      %p448 = scmp.eq.s32.totalorder %s36, 0
      %p449 = por %p447, %p448
      %p450 = scmp.ne.s32.totalorder %s438, %s439
      %p451 = scmp.eq.s32.totalorder %s37, 3
      %p452 = por %p450, %p451
      %p454 = scmp.ne.s32.totalorder %s439, %s453
      %p455 = scmp.eq.s32.totalorder %s37, 0
      %p456 = por %p454, %p455
      %s457 = ssub.s32 %s38, %s50
      %p458 = scmp.eq.s32.totalorder %s457, 0
      %s460 = sadd.s32 %s459, 1
      %s461 = scalar_select %p458, %s459, %s460
      %p464 = pneg %p458
      %p465 = scmp.eq.s32.totalorder %s31, 3
      %p466 = por %p464, %p465
      %p467 = scmp.ne.s32.totalorder %s459, %s462
      %p468 = scmp.eq.s32.totalorder %s31, 0
      %p469 = por %p467, %p468
      %p470 = scmp.ne.s32.totalorder %s459, %s462
      %p471 = scmp.eq.s32.totalorder %s36, 3
      %p472 = por %p470, %p471
      %p473 = scmp.ne.s32.totalorder %s462, %s463
      %p474 = scmp.eq.s32.totalorder %s36, 0
      %p475 = por %p473, %p474
      %p476 = scmp.ne.s32.totalorder %s462, %s463
      %p477 = scmp.eq.s32.totalorder %s37, 3
      %p478 = por %p476, %p477
      %p480 = scmp.ne.s32.totalorder %s463, %s479
      %p481 = scmp.eq.s32.totalorder %s37, 0
      %p482 = por %p480, %p481
      %p483 = scmp.le.s32.totalorder 1, %s31
      %p484 = scmp.lt.s32.totalorder %s31, 5
      %p485 = pnand %p483, %p484
      %p486 = pneg %p485
      // Predicated region
      $region9: #{tpu_custom_call.1} parent=5 // pred_check
        _
      $region10: #{tpu_custom_call.1} parent=5 // pred_check_branch
        %488 = sbr.rel (%p485) target = $region12
      $region11: #{tpu_custom_call.1} parent=5 // pred_region
        %s489 = ssub.s32 %s31, 1
        // Predicated region
        $region13: #{tpu_custom_call.1} parent=11 // pred_check
          %p490 = pneg %p428
        $region14: #{tpu_custom_call.1} parent=11 // pred_check_branch
          %492 = sbr.rel (%p490) target = $region16
        $region15: #{tpu_custom_call.1} parent=11 // pred_region
          _
        $region16: #{tpu_custom_call.1} parent=11 // pred_fallthru
          _
        // Predicated region
        $region17: #{tpu_custom_call.1} parent=11 // pred_check
          %p493 = pneg %p449
        $region18: #{tpu_custom_call.1} parent=11 // pred_check_branch
          %495 = sbr.rel (%p493) target = $region20
        $region19: #{tpu_custom_call.1} parent=11 // pred_region
          _
        $region20: #{tpu_custom_call.1} parent=11 // pred_fallthru
          _
      $region12: #{tpu_custom_call.1} parent=5 // pred_fallthru
        _
      %p496 = scmp.lt.s32.totalorder %s31, 4
      // Predicated region
      $region21: #{tpu_custom_call.1} parent=5 // pred_check
        %p497 = pneg %p496
      $region22: #{tpu_custom_call.1} parent=5 // pred_check_branch
        %499 = sbr.rel (%p497) target = $region24
      $region23: #{tpu_custom_call.1} parent=5 // pred_region
        // Predicated region
        $region25: #{tpu_custom_call.1} parent=23 // pred_check
          %p500 = pneg %p63
        $region26: #{tpu_custom_call.1} parent=23 // pred_check_branch
          %502 = sbr.rel (%p500) target = $region28
        $region27: #{tpu_custom_call.1} parent=23 // pred_region
          %s503 = sand.u32 %s53, 1
          %s504 = scalar_lea.sflag [#allocation3], %s503
          %s505 = sand.u32 %s53, 1
          %s506 = smul.addr %s505, 8
          %s507 = scalar_lea.vmem [#allocation2], %s506
          %s509 = ssub.s32 128, 128
          %510 = vsyncadd %s504, %s509
          %s511 = smul.addr %s38, 128
          %s512 = scalar_lea.hbm %s0, %s511
          %s514 = sshll.u32 %s507, 4
          %s515 = int_to_ptr.vmem [resolvable:$true] %s514
          %517 = dma.hbm_to_vmem [thread:$0]  %s512, 128, %s515, %s504
        $region28: #{tpu_custom_call.1} parent=23 // pred_fallthru
          _
        // Predicated region
        $region29: #{tpu_custom_call.1} parent=23 // pred_check
          %p518 = pneg %p89
        $region30: #{tpu_custom_call.1} parent=23 // pred_check_branch
          %520 = sbr.rel (%p518) target = $region32
        $region31: #{tpu_custom_call.1} parent=23 // pred_region
          %p521 = scmp.lt.s32.totalorder %s38, 1
          %s522 = scalar_select %p521, %s38, 1
          %s523 = scalar_lea.vmem %s1, %s522
        $region32: #{tpu_custom_call.1} parent=23 // pred_fallthru
          _
        // Predicated region
        $region33: #{tpu_custom_call.1} parent=23 // pred_check
          %p524 = pneg %p115
        $region34: #{tpu_custom_call.1} parent=23 // pred_check_branch
          %526 = sbr.rel (%p524) target = $region36
        $region35: #{tpu_custom_call.1} parent=23 // pred_region
          %p527 = scmp.lt.s32.totalorder %s39, 1
          %s528 = scalar_select %p527, %s39, 1
          %s529 = scalar_lea.vmem %s2, %s528
        $region36: #{tpu_custom_call.1} parent=23 // pred_fallthru
          _
        // Predicated region
        $region37: #{tpu_custom_call.1} parent=23 // pred_check
          %p530 = pneg %p141
        $region38: #{tpu_custom_call.1} parent=23 // pred_check_branch
          %532 = sbr.rel (%p530) target = $region40
        $region39: #{tpu_custom_call.1} parent=23 // pred_region
          %p533 = scmp.lt.s32.totalorder %s39, 1
          %s534 = scalar_select %p533, %s39, 1
          %s535 = scalar_lea.vmem %s3, %s534
        $region40: #{tpu_custom_call.1} parent=23 // pred_fallthru
          _
        // Predicated region
        $region41: #{tpu_custom_call.1} parent=23 // pred_check
          %p536 = pneg %p167
        $region42: #{tpu_custom_call.1} parent=23 // pred_check_branch
          %538 = sbr.rel (%p536) target = $region44
        $region43: #{tpu_custom_call.1} parent=23 // pred_region
          %p539 = scmp.lt.s32.totalorder %s39, 1
          %s540 = scalar_select %p539, %s39, 1
          %s541 = smul.addr %s540, 4
          %s542 = smul.addr %s541, 4
          %s543 = scalar_lea.vmem %s4, %s542
        $region44: #{tpu_custom_call.1} parent=23 // pred_fallthru
          _
        // Predicated region
        $region45: #{tpu_custom_call.1} parent=23 // pred_check
          %p544 = pneg %p193
        $region46: #{tpu_custom_call.1} parent=23 // pred_check_branch
          %546 = sbr.rel (%p544) target = $region48
        $region47: #{tpu_custom_call.1} parent=23 // pred_region
          %p547 = scmp.lt.s32.totalorder %s39, 1
          %s548 = scalar_select %p547, %s39, 1
          %s549 = scalar_lea.vmem %s5, %s548
        $region48: #{tpu_custom_call.1} parent=23 // pred_fallthru
          _
        // Predicated region
        $region49: #{tpu_custom_call.1} parent=23 // pred_check
          %p550 = pneg %p219
        $region50: #{tpu_custom_call.1} parent=23 // pred_check_branch
          %552 = sbr.rel (%p550) target = $region52
        $region51: #{tpu_custom_call.1} parent=23 // pred_region
          %p553 = scmp.lt.s32.totalorder %s39, 1
          %s554 = scalar_select %p553, %s39, 1
          %s555 = smul.addr %s554, 4
          %s556 = smul.addr %s555, 4
          %s557 = scalar_lea.vmem %s6, %s556
        $region52: #{tpu_custom_call.1} parent=23 // pred_fallthru
          _
        // Predicated region
        $region53: #{tpu_custom_call.1} parent=23 // pred_check
          %p558 = pneg %p245
        $region54: #{tpu_custom_call.1} parent=23 // pred_check_branch
          %560 = sbr.rel (%p558) target = $region56
        $region55: #{tpu_custom_call.1} parent=23 // pred_region
          %p561 = scmp.lt.s32.totalorder %s39, 1
          %s562 = scalar_select %p561, %s39, 1
          %s563 = scalar_lea.vmem %s7, %s562
        $region56: #{tpu_custom_call.1} parent=23 // pred_fallthru
          _
        // Predicated region
        $region57: #{tpu_custom_call.1} parent=23 // pred_check
          %p564 = pneg %p271
        $region58: #{tpu_custom_call.1} parent=23 // pred_check_branch
          %566 = sbr.rel (%p564) target = $region60
        $region59: #{tpu_custom_call.1} parent=23 // pred_region
          %p567 = scmp.lt.s32.totalorder %s39, 1
          %s568 = scalar_select %p567, %s39, 1
          %s569 = scalar_lea.vmem %s8, %s568
        $region60: #{tpu_custom_call.1} parent=23 // pred_fallthru
          _
        // Predicated region
        $region61: #{tpu_custom_call.1} parent=23 // pred_check
          %p570 = pneg %p297
        $region62: #{tpu_custom_call.1} parent=23 // pred_check_branch
          %572 = sbr.rel (%p570) target = $region64
        $region63: #{tpu_custom_call.1} parent=23 // pred_region
          %s573 = sand.u32 %s31, 1
          %s574 = scalar_lea.sflag [#allocation6], %s573
          %s575 = sand.u32 %s287, 1
          %s576 = scalar_lea.vmem [#allocation5], %s575
          %s578 = ssub.s32 16, 16
          %579 = vsyncadd %s574, %s578
          %s580 = smul.addr %s39, 16
          %s581 = scalar_lea.hbm %s9, %s580
          %s583 = sshll.u32 %s576, 4
          %s584 = int_to_ptr.vmem [resolvable:$true] %s583
          %586 = dma.hbm_to_vmem [thread:$0]  %s581, 16, %s584, %s574
        $region64: #{tpu_custom_call.1} parent=23 // pred_fallthru
          _
        // Predicated region
        $region65: #{tpu_custom_call.1} parent=23 // pred_check
          %p587 = pneg %p323
        $region66: #{tpu_custom_call.1} parent=23 // pred_check_branch
          %589 = sbr.rel (%p587) target = $region68
        $region67: #{tpu_custom_call.1} parent=23 // pred_region
          %p590 = scmp.lt.s32.totalorder %s39, 1
          %s591 = scalar_select %p590, %s39, 1
          %s592 = smul.addr %s591, 4
          %s593 = smul.addr %s592, 4
          %s594 = scalar_lea.vmem %s10, %s593
        $region68: #{tpu_custom_call.1} parent=23 // pred_fallthru
          _
        // Predicated region
        $region69: #{tpu_custom_call.1} parent=23 // pred_check
          %p595 = pneg %p349
        $region70: #{tpu_custom_call.1} parent=23 // pred_check_branch
          %597 = sbr.rel (%p595) target = $region72
        $region71: #{tpu_custom_call.1} parent=23 // pred_region
          %s598 = sand.u32 %s31, 1
          %s599 = scalar_lea.sflag [#allocation6], %s598
          %s600 = sand.u32 %s339, 1
          %s601 = scalar_lea.vmem [#allocation7], %s600
          %s603 = ssub.s32 16, 16
          %604 = vsyncadd %s599, %s603
          %s605 = smul.addr %s39, 16
          %s606 = scalar_lea.hbm %s11, %s605
          %s608 = sshll.u32 %s601, 4
          %s609 = int_to_ptr.vmem [resolvable:$true] %s608
          %611 = dma.hbm_to_vmem [thread:$0]  %s606, 16, %s609, %s599
        $region72: #{tpu_custom_call.1} parent=23 // pred_fallthru
          _
        // Predicated region
        $region73: #{tpu_custom_call.1} parent=23 // pred_check
          %p612 = pneg %p375
        $region74: #{tpu_custom_call.1} parent=23 // pred_check_branch
          %614 = sbr.rel (%p612) target = $region76
        $region75: #{tpu_custom_call.1} parent=23 // pred_region
          %p615 = scmp.lt.s32.totalorder %s39, 1
          %s616 = scalar_select %p615, %s39, 1
          %s617 = smul.addr %s616, 8
          %s618 = smul.addr %s617, 4
          %s619 = scalar_lea.vmem %s12, %s618
        $region76: #{tpu_custom_call.1} parent=23 // pred_fallthru
          _
        // Predicated region
        $region77: #{tpu_custom_call.1} parent=23 // pred_check
          %p620 = pneg %p401
        $region78: #{tpu_custom_call.1} parent=23 // pred_check_branch
          %622 = sbr.rel (%p620) target = $region80
        $region79: #{tpu_custom_call.1} parent=23 // pred_region
          %p623 = scmp.lt.s32.totalorder %s39, 1
          %s624 = scalar_select %p623, %s39, 1
          %s625 = scalar_lea.vmem %s13, %s624
        $region80: #{tpu_custom_call.1} parent=23 // pred_fallthru
          _
      $region24: #{tpu_custom_call.1} parent=5 // pred_fallthru
        _
      %p626 = scmp.le.s32.totalorder 1, %s31
      %p627 = scmp.lt.s32.totalorder %s31, 5
      %p628 = pnand %p626, %p627
      %p629 = pneg %p628
      // Predicated region
      $region81: #{tpu_custom_call.1} parent=5 // pred_check
        _
      $region82: #{tpu_custom_call.1} parent=5 // pred_check_branch
        %631 = sbr.rel (%p628) target = $region84
      $region83: #{tpu_custom_call.1} parent=5 // pred_region
        %s632 = ssub.s32 %s31, 1
        %s633 = sand.u32 %s56, 1
        %s634 = scalar_lea.sflag [#allocation3], %s633
        %s635 = sand.u32 %s56, 1
        %s636 = smul.addr %s635, 8
        %s637 = scalar_lea.vmem [#allocation2], %s636
        // Predicated region
        $region85: #{tpu_custom_call.1} parent=83 // pred_check
          %p638 = pneg %p69
        $region86: #{tpu_custom_call.1} parent=83 // pred_check_branch
          %640 = sbr.rel (%p638) target = $region88
        $region87: #{tpu_custom_call.1} parent=83 // pred_region
          %641 = dma.done %s634, 128
        $region88: #{tpu_custom_call.1} parent=83 // pred_fallthru
          _
        %s642 = sand.u32 %s36, 1
        %s643 = scalar_lea.sflag [#allocation6], %s642
        %s644 = sand.u32 %s290, 1
        %s645 = scalar_lea.vmem [#allocation5], %s644
        // Predicated region
        $region89: #{tpu_custom_call.1} parent=83 // pred_check
          %p646 = pneg %p303
        $region90: #{tpu_custom_call.1} parent=83 // pred_check_branch
          %648 = sbr.rel (%p646) target = $region92
        $region91: #{tpu_custom_call.1} parent=83 // pred_region
          %649 = dma.done %s643, 16
        $region92: #{tpu_custom_call.1} parent=83 // pred_fallthru
          _
        %s650 = sand.u32 %s36, 1
        %s651 = scalar_lea.sflag [#allocation6], %s650
        %s652 = sand.u32 %s342, 1
        %s653 = scalar_lea.vmem [#allocation7], %s652
        // Predicated region
        $region93: #{tpu_custom_call.1} parent=83 // pred_check
          %p654 = pneg %p355
        $region94: #{tpu_custom_call.1} parent=83 // pred_check_branch
          %656 = sbr.rel (%p654) target = $region96
        $region95: #{tpu_custom_call.1} parent=83 // pred_region
          %657 = dma.done %s651, 16
        $region96: #{tpu_custom_call.1} parent=83 // pred_fallthru
          _
        %s658 = sand.u32 %s56, 1
        %s659 = scalar_lea.sflag [#allocation3], %s658
        %s660 = sand.u32 %s56, 1
        %s661 = smul.addr %s660, 8
        %s662 = scalar_lea.vmem [#allocation2], %s661
        %p663 = pneg %p69
        %p664 = pneg %p66
        %p665 = scmp.lt.s32.totalorder %s40, 1
        %s666 = scalar_select %p665, %s40, 1
        %s667 = scalar_lea.vmem %s1, %s666
        %p668 = pneg %p95
        %p669 = pneg %p92
        %p670 = scmp.lt.s32.totalorder %s41, 1
        %s671 = scalar_select %p670, %s41, 1
        %s672 = scalar_lea.vmem %s2, %s671
        %p673 = pneg %p121
        %p674 = pneg %p118
        %p675 = scmp.lt.s32.totalorder %s41, 1
        %s676 = scalar_select %p675, %s41, 1
        %s677 = scalar_lea.vmem %s3, %s676
        %p678 = pneg %p147
        %p679 = pneg %p144
        %p680 = scmp.lt.s32.totalorder %s41, 1
        %s681 = scalar_select %p680, %s41, 1
        %s682 = smul.addr %s681, 4
        %s683 = smul.addr %s682, 4
        %s684 = scalar_lea.vmem %s4, %s683
        %p685 = pneg %p173
        %p686 = pneg %p170
        %p687 = scmp.lt.s32.totalorder %s41, 1
        %s688 = scalar_select %p687, %s41, 1
        %s689 = scalar_lea.vmem %s5, %s688
        %p690 = pneg %p199
        %p691 = pneg %p196
        %p692 = scmp.lt.s32.totalorder %s41, 1
        %s693 = scalar_select %p692, %s41, 1
        %s694 = smul.addr %s693, 4
        %s695 = smul.addr %s694, 4
        %s696 = scalar_lea.vmem %s6, %s695
        %p697 = pneg %p225
        %p698 = pneg %p222
        %p699 = scmp.lt.s32.totalorder %s41, 1
        %s700 = scalar_select %p699, %s41, 1
        %s701 = scalar_lea.vmem %s7, %s700
        %p702 = pneg %p251
        %p703 = pneg %p248
        %p704 = scmp.lt.s32.totalorder %s41, 1
        %s705 = scalar_select %p704, %s41, 1
        %s706 = scalar_lea.vmem %s8, %s705
        %p707 = pneg %p277
        %p708 = pneg %p274
        %s709 = sand.u32 %s36, 1
        %s710 = scalar_lea.sflag [#allocation6], %s709
        %s711 = sand.u32 %s290, 1
        %s712 = scalar_lea.vmem [#allocation5], %s711
        %p713 = pneg %p303
        %p714 = pneg %p300
        %p715 = scmp.lt.s32.totalorder %s41, 1
        %s716 = scalar_select %p715, %s41, 1
        %s717 = smul.addr %s716, 4
        %s718 = smul.addr %s717, 4
        %s719 = scalar_lea.vmem %s10, %s718
        %p720 = pneg %p329
        %p721 = pneg %p326
        %s722 = sand.u32 %s36, 1
        %s723 = scalar_lea.sflag [#allocation6], %s722
        %s724 = sand.u32 %s342, 1
        %s725 = scalar_lea.vmem [#allocation7], %s724
        %p726 = pneg %p355
        %p727 = pneg %p352
        %p728 = scmp.lt.s32.totalorder %s41, 1
        %s729 = scalar_select %p728, %s41, 1
        %s730 = smul.addr %s729, 8
        %s731 = smul.addr %s730, 4
        %s732 = scalar_lea.vmem %s12, %s731
        %p733 = pneg %p381
        %p734 = pneg %p378
        %p735 = scmp.lt.s32.totalorder %s41, 1
        %s736 = scalar_select %p735, %s41, 1
        %s737 = scalar_lea.vmem %s13, %s736
        %p738 = pneg %p407
        %p739 = pneg %p404
        %p740 = pneg %p428
        %p741 = pneg %p425
        %p742 = pneg %p449
        %p743 = pneg %p446
        %p744 = pneg %p475
        %p745 = pneg %p472
        %s746 = sand.u32 %s462, 1
        %s747 = scalar_lea.sflag [#allocation4], %s746
        %s748 = sand.u32 %s462, 1
        %s749 = smul.addr %s748, 8
        %s750 = scalar_lea.vmem [#allocation8], %s749
        %p751 = scmp.lt.s32.totalorder %s40, 1
        %s752 = scalar_select %p751, %s40, 1
        %s753 = scalar_lea.vmem %s1, %s752
        %p754 = scmp.lt.s32.totalorder %s41, 1
        %s755 = scalar_select %p754, %s41, 1
        %s756 = scalar_lea.vmem %s2, %s755
        %p757 = scmp.lt.s32.totalorder %s41, 1
        %s758 = scalar_select %p757, %s41, 1
        %s759 = scalar_lea.vmem %s3, %s758
        %p760 = scmp.lt.s32.totalorder %s41, 1
        %s761 = scalar_select %p760, %s41, 1
        %s762 = smul.addr %s761, 4
        %s763 = smul.addr %s762, 4
        %s764 = scalar_lea.vmem %s4, %s763
        %p765 = scmp.lt.s32.totalorder %s41, 1
        %s766 = scalar_select %p765, %s41, 1
        %s767 = scalar_lea.vmem %s5, %s766
        %p768 = scmp.lt.s32.totalorder %s41, 1
        %s769 = scalar_select %p768, %s41, 1
        %s770 = smul.addr %s769, 4
        %s771 = smul.addr %s770, 4
        %s772 = scalar_lea.vmem %s6, %s771
        %p773 = scmp.lt.s32.totalorder %s41, 1
        %s774 = scalar_select %p773, %s41, 1
        %s775 = scalar_lea.vmem %s7, %s774
        %p776 = scmp.lt.s32.totalorder %s41, 1
        %s777 = scalar_select %p776, %s41, 1
        %s778 = scalar_lea.vmem %s8, %s777
        %p779 = scmp.lt.s32.totalorder %s41, 1
        %s780 = scalar_select %p779, %s41, 1
        %s781 = smul.addr %s780, 4
        %s782 = smul.addr %s781, 4
        %s783 = scalar_lea.vmem %s10, %s782
        %p784 = scmp.lt.s32.totalorder %s41, 1
        %s785 = scalar_select %p784, %s41, 1
        %s786 = smul.addr %s785, 8
        %s787 = smul.addr %s786, 4
        %s788 = scalar_lea.vmem %s12, %s787
        %p789 = scmp.lt.s32.totalorder %s41, 1
        %s790 = scalar_select %p789, %s41, 1
        %s791 = scalar_lea.vmem %s13, %s790
        %p793 = scmp.eq.s32.totalorder %s41, 0
        // Predicated region
        $region97: #{tpu_custom_call.1} parent=83 // pred_check
          %p794 = pneg %p793
        $region98: #{tpu_custom_call.1} parent=83 // pred_check_branch
          %796 = sbr.rel (%p794) target = $region100
        $region99: #{tpu_custom_call.1} parent=83 // pred_region
          %v797 = vld [vmem:[%s637] sm:$0xff]
          %vm798 = vcmask 261120
          %799 = vst.msk [vmem:[%s750] sm:$0xff] %vm798, %v797
        $region100: #{tpu_custom_call.1} parent=83 // pred_fallthru
          _
        %v800 = vld [vmem:[%s750] sm:$0xff]
        %v801 = vld [vmem:[%s753] sm:$0x1]
        %v802 = vld [vmem:[%s756] sm:$0x1]
        %v803 = vld [vmem:[%s759] sm:$0x1]
        %vm804 = vcmask 261120
        %v805 = vsel %vm804, %v800, 0.0
        %806 = vadd.xlane.f32.xlu0 %v805
        %v807 = vpop.xlane.xlu0 %806
        %v808 = vrcp.pop 32.0
        %v809 = vmul.f32 %v807, %v808
        %v810 = vsub.f32 %v800, %v809
        %v811 = vmul.f32 %v810, %v810
        %v812 = vsel %vm804, %v811, 0.0
        %813 = vadd.xlane.f32.xlu0 %v812
        %v814 = vpop.xlane.xlu0 %813
        %v815 = vrcp.pop 31.0
        %v816 = vmul.f32 %v814, %v815
        %v817 = vrsqrt.pop %v816
        %v818 = vmul.f32 %v816, %v817
        %vm819 = vcmp.eq.f32.partialorder %v816, inf
        %v820 = vsel %vm819, %v816, %v818
        %vm821 = vcmp.eq.f32.partialorder %v816, 0.0
        %v822 = vand.u32 %v816, 2147483648
        %v823 = vsel %vm821, %v822, %v820
        %v824 = vadd.f32 %v823, 1e-06
        %v825 = vrcp.pop %v824
        %v827 = vlaneseq
        %v828 = vshrl.u32 %v827, 7
        %v829 = vsub.s32 0, %v828
        %v830 = vrot.slane %v802, %v829
        %v832 = vmul.f32 %v830, %v810
        %v833 = vmul.f32 %v832, %v825
        %v835 = vlaneseq
        %v836 = vshrl.u32 %v835, 7
        %v837 = vsub.s32 0, %v836
        %v838 = vrot.slane %v803, %v837
        %v840 = vadd.f32 %v833, %v838
        %v841 = vpack.c.bf16 %v840, %v840
        %v842 = vld [vmem:[%s764] sm:$0xf]
        %v843 = vld [vmem:[%s764 + $0x4] sm:$0xf]
        %v844 = vld [vmem:[%s764 + $0x8] sm:$0xf]
        %v845 = vld [vmem:[%s764 + $0xc] sm:$0xf]
        %v846 = vld [vmem:[%s767] sm:$0x1]
        %v848 = vlaneseq
        %v849 = vshrl.u32 %v848, 7
        %v850 = vsub.s32 0, %v849
        %v851 = vrot.slane %v846, %v850
        %v857 = vunpack.c.l.b16 %v842
        %v858 = vunpack.c.l.b16 %v843
        %v859 = vunpack.c.l.b16 %v844
        %v860 = vunpack.c.l.b16 %v845
        %v861 = vpack.c.b16 %v858, %v857
        %v862 = vpack.c.b16 %v860, %v859
        %v866 = vsel %vm804, %v841, 0
        %868 = vmatprep.subr.bf16.mxu0 0
        %869 = vmatpush1.bf16.msra.mxu0 %v861
        %870 = vmatprep.subr.bf16.mxu0 0
        %871 = vmatpush1.bf16.msra.mxu0 %v862
        %872 = vmatprep.subr.bf16.mxu0 0
        %873 = vmatpush1.bf16.msra.mxu0 0
        %874 = vmatprep.subr.bf16.mxu0 0
        %875 = vmatpush1.bf16.msra.mxu0 0
        %876 = vmatprep.subr.bf16.mxu0 0
        %877 = vmatpush1.bf16.msra.mxu0 0
        %878 = vmatprep.subr.bf16.mxu0 0
        %879 = vmatpush1.bf16.msra.mxu0 0
        %880 = vmatprep.subr.bf16.mxu0 0
        %881 = vmatpush1.bf16.msra.mxu0 0
        %882 = vmatprep.subr.bf16.mxu0 0
        %883 = vmatpush1.bf16.msra.mxu0 0
        %884 = vmatprep.subr.bf16.mxu0 0
        %885 = vmatpush1.bf16.msra.mxu0 0
        %886 = vmatprep.subr.bf16.mxu0 0
        %887 = vmatpush1.bf16.msra.mxu0 0
        %888 = vmatprep.subr.bf16.mxu0 0
        %889 = vmatpush1.bf16.msra.mxu0 0
        %890 = vmatprep.subr.bf16.mxu0 0
        %891 = vmatpush1.bf16.msra.mxu0 0
        %892 = vmatprep.subr.bf16.mxu0 0
        %893 = vmatpush1.bf16.msra.mxu0 0
        %894 = vmatprep.subr.bf16.mxu0 0
        %895 = vmatpush1.bf16.msra.mxu0 0
        %896 = vmatprep.subr.bf16.mxu0 0
        %897 = vmatpush1.bf16.msra.mxu0 0
        %898 = vmatprep.subr.bf16.mxu0 0
        %899 = vmatpush1.bf16.msra.mxu0 0
        %900 = vmatprep.mubr.bf16.mxu0 0
        %901 = vmatmul.mubr.bf16.gmra.mrb[0].mxu0 %v866
        %v902 = vpop.f32.mrb[0].mxu0
        %v903 = vadd.f32 %v851, %v902
        %v904 = vpop.f32.mrb[0].mxu0
        %v905 = vpop.f32.mrb[0].mxu0
        %v906 = vpop.f32.mrb[0].mxu0
        %907 = vdwg.mxu0
        %909 = vrot.lane.b32.xlu0 %v903, 120
        %v910 = vpop.permute.xlu0 %909
        %912 = vrot.lane.b32.xlu0 %v903, 112
        %v913 = vpop.permute.xlu0 %912
        %915 = vrot.lane.b32.xlu0 %v903, 104
        %v916 = vpop.permute.xlu0 %915
        %v918 = vcombine.low %v903, %v913
        %v919 = vcombine.high %v903, %v913
        %v921 = vunpack.c.l.s4 1983009808
        %v922 = vunpack.c.0.s8 %v921
        %v923 = vlaneseq
        %v924 = vshrl.u32 %v923, 7
        %v925 = vsub.s32 %v922, %v924
        %v926 = vrot.slane %v918, %v925
        %v928 = vunpack.c.l.s4 1983009808
        %v929 = vunpack.c.0.s8 %v928
        %v930 = vlaneseq
        %v931 = vshrl.u32 %v930, 7
        %v932 = vsub.s32 %v929, %v931
        %v933 = vrot.slane %v919, %v932
        %v934 = vcombine.low %v910, %v916
        %v935 = vcombine.high %v910, %v916
        %v937 = vunpack.c.l.s4 1983009808
        %v938 = vunpack.c.0.s8 %v937
        %v939 = vlaneseq
        %v940 = vshrl.u32 %v939, 7
        %v941 = vsub.s32 %v938, %v940
        %v942 = vrot.slane %v934, %v941
        %v944 = vunpack.c.l.s4 1983009808
        %v945 = vunpack.c.0.s8 %v944
        %v946 = vlaneseq
        %v947 = vshrl.u32 %v946, 7
        %v948 = vsub.s32 %v945, %v947
        %v949 = vrot.slane %v935, %v948
        %v950 = vcombine.low %v926, %v942
        %v951 = vcombine.high %v926, %v942
        %v953 = vunpack.c.l.s4 1934713408
        %v954 = vunpack.c.0.s8 %v953
        %v955 = vlaneseq
        %v956 = vshrl.u32 %v955, 7
        %v957 = vsub.s32 %v954, %v956
        %v958 = vrot.slane %v950, %v957
        %v960 = vunpack.c.l.s4 1934713408
        %v961 = vunpack.c.0.s8 %v960
        %v962 = vlaneseq
        %v963 = vshrl.u32 %v962, 7
        %v964 = vsub.s32 %v961, %v963
        %v965 = vrot.slane %v951, %v964
        %v966 = vcombine.low %v933, %v949
        %v967 = vcombine.high %v933, %v949
        %v969 = vunpack.c.l.s4 1934713408
        %v970 = vunpack.c.0.s8 %v969
        %v971 = vlaneseq
        %v972 = vshrl.u32 %v971, 7
        %v973 = vsub.s32 %v970, %v972
        %v974 = vrot.slane %v966, %v973
        %v976 = vunpack.c.l.s4 1934713408
        %v977 = vunpack.c.0.s8 %v976
        %v978 = vlaneseq
        %v979 = vshrl.u32 %v978, 7
        %v980 = vsub.s32 %v977, %v979
        %v981 = vrot.slane %v967, %v980
        %v982 = vcombine.high %v958, 0.0
        %v983 = vcombine.high %v965, 0.0
        %v984 = vcombine.high %v974, 0.0
        %v985 = vcombine.high %v981, 0.0
        %v986 = vcombine.low %v958, %v965
        %v988 = vunpack.c.l.s4 1983009808
        %v989 = vunpack.c.0.s8 %v988
        %v990 = vlaneseq
        %v991 = vshrl.u32 %v990, 7
        %v992 = vsub.s32 %v989, %v991
        %v993 = vrot.slane %v986, %v992
        %v994 = vcombine.low %v982, %v983
        %v996 = vunpack.c.l.s4 1983009808
        %v997 = vunpack.c.0.s8 %v996
        %v998 = vlaneseq
        %v999 = vshrl.u32 %v998, 7
        %v1000 = vsub.s32 %v997, %v999
        %v1001 = vrot.slane %v994, %v1000
        %v1002 = vcombine.low %v974, %v981
        %v1004 = vunpack.c.l.s4 1983009808
        %v1005 = vunpack.c.0.s8 %v1004
        %v1006 = vlaneseq
        %v1007 = vshrl.u32 %v1006, 7
        %v1008 = vsub.s32 %v1005, %v1007
        %v1009 = vrot.slane %v1002, %v1008
        %v1010 = vcombine.low %v984, %v985
        %v1012 = vunpack.c.l.s4 1983009808
        %v1013 = vunpack.c.0.s8 %v1012
        %v1014 = vlaneseq
        %v1015 = vshrl.u32 %v1014, 7
        %v1016 = vsub.s32 %v1013, %v1015
        %v1017 = vrot.slane %v1010, %v1016
        %v1018 = vcombine.low %v993, %v1001
        %v1019 = vcombine.high %v993, %v1001
        %v1021 = vunpack.c.l.s4 1934713408
        %v1022 = vunpack.c.0.s8 %v1021
        %v1023 = vlaneseq
        %v1024 = vshrl.u32 %v1023, 7
        %v1025 = vsub.s32 %v1022, %v1024
        %v1026 = vrot.slane %v1018, %v1025
        %v1028 = vunpack.c.l.s4 1934713408
        %v1029 = vunpack.c.0.s8 %v1028
        %v1030 = vlaneseq
        %v1031 = vshrl.u32 %v1030, 7
        %v1032 = vsub.s32 %v1029, %v1031
        %v1033 = vrot.slane %v1019, %v1032
        %v1034 = vcombine.low %v1009, %v1017
        %v1035 = vcombine.high %v1009, %v1017
        %v1037 = vunpack.c.l.s4 1934713408
        %v1038 = vunpack.c.0.s8 %v1037
        %v1039 = vlaneseq
        %v1040 = vshrl.u32 %v1039, 7
        %v1041 = vsub.s32 %v1038, %v1040
        %v1042 = vrot.slane %v1034, %v1041
        %v1044 = vunpack.c.l.s4 1934713408
        %v1045 = vunpack.c.0.s8 %v1044
        %v1046 = vlaneseq
        %v1047 = vshrl.u32 %v1046, 7
        %v1048 = vsub.s32 %v1045, %v1047
        %v1049 = vrot.slane %v1035, %v1048
        %v1050 = vcombine.low %v1026, %v1042
        %v1051 = vcombine.high %v1026, %v1042
        %v1052 = vcombine.low %v1033, %v1049
        %v1053 = vcombine.high %v1033, %v1049
        %1054 = vrot.lane.b32.xlu0 %v903, 96
        %v1055 = vpop.permute.xlu0 %1054
        %1056 = vrot.lane.b32.xlu0 %v910, 96
        %v1057 = vpop.permute.xlu0 %1056
        %1058 = vrot.lane.b32.xlu0 %v913, 96
        %v1059 = vpop.permute.xlu0 %1058
        %1060 = vrot.lane.b32.xlu0 %v916, 96
        %v1061 = vpop.permute.xlu0 %1060
        %v1066 = vcombine.low %v1055, %v1059
        %v1067 = vcombine.high %v1055, %v1059
        %v1069 = vunpack.c.l.s4 1983009808
        %v1070 = vunpack.c.0.s8 %v1069
        %v1071 = vlaneseq
        %v1072 = vshrl.u32 %v1071, 7
        %v1073 = vsub.s32 %v1070, %v1072
        %v1074 = vrot.slane %v1066, %v1073
        %v1076 = vunpack.c.l.s4 1983009808
        %v1077 = vunpack.c.0.s8 %v1076
        %v1078 = vlaneseq
        %v1079 = vshrl.u32 %v1078, 7
        %v1080 = vsub.s32 %v1077, %v1079
        %v1081 = vrot.slane %v1067, %v1080
        %v1082 = vcombine.low %v1057, %v1061
        %v1083 = vcombine.high %v1057, %v1061
        %v1085 = vunpack.c.l.s4 1983009808
        %v1086 = vunpack.c.0.s8 %v1085
        %v1087 = vlaneseq
        %v1088 = vshrl.u32 %v1087, 7
        %v1089 = vsub.s32 %v1086, %v1088
        %v1090 = vrot.slane %v1082, %v1089
        %v1092 = vunpack.c.l.s4 1983009808
        %v1093 = vunpack.c.0.s8 %v1092
        %v1094 = vlaneseq
        %v1095 = vshrl.u32 %v1094, 7
        %v1096 = vsub.s32 %v1093, %v1095
        %v1097 = vrot.slane %v1083, %v1096
        %v1098 = vcombine.low %v1074, %v1090
        %v1099 = vcombine.high %v1074, %v1090
        %v1101 = vunpack.c.l.s4 1934713408
        %v1102 = vunpack.c.0.s8 %v1101
        %v1103 = vlaneseq
        %v1104 = vshrl.u32 %v1103, 7
        %v1105 = vsub.s32 %v1102, %v1104
        %v1106 = vrot.slane %v1098, %v1105
        %v1108 = vunpack.c.l.s4 1934713408
        %v1109 = vunpack.c.0.s8 %v1108
        %v1110 = vlaneseq
        %v1111 = vshrl.u32 %v1110, 7
        %v1112 = vsub.s32 %v1109, %v1111
        %v1113 = vrot.slane %v1099, %v1112
        %v1114 = vcombine.low %v1081, %v1097
        %v1115 = vcombine.high %v1081, %v1097
        %v1117 = vunpack.c.l.s4 1934713408
        %v1118 = vunpack.c.0.s8 %v1117
        %v1119 = vlaneseq
        %v1120 = vshrl.u32 %v1119, 7
        %v1121 = vsub.s32 %v1118, %v1120
        %v1122 = vrot.slane %v1114, %v1121
        %v1124 = vunpack.c.l.s4 1934713408
        %v1125 = vunpack.c.0.s8 %v1124
        %v1126 = vlaneseq
        %v1127 = vshrl.u32 %v1126, 7
        %v1128 = vsub.s32 %v1125, %v1127
        %v1129 = vrot.slane %v1115, %v1128
        %v1130 = vcombine.high %v1106, 0.0
        %v1131 = vcombine.high %v1113, 0.0
        %v1132 = vcombine.high %v1122, 0.0
        %v1133 = vcombine.high %v1129, 0.0
        %v1134 = vcombine.low %v1106, %v1113
        %v1136 = vunpack.c.l.s4 1983009808
        %v1137 = vunpack.c.0.s8 %v1136
        %v1138 = vlaneseq
        %v1139 = vshrl.u32 %v1138, 7
        %v1140 = vsub.s32 %v1137, %v1139
        %v1141 = vrot.slane %v1134, %v1140
        %v1142 = vcombine.low %v1130, %v1131
        %v1144 = vunpack.c.l.s4 1983009808
        %v1145 = vunpack.c.0.s8 %v1144
        %v1146 = vlaneseq
        %v1147 = vshrl.u32 %v1146, 7
        %v1148 = vsub.s32 %v1145, %v1147
        %v1149 = vrot.slane %v1142, %v1148
        %v1150 = vcombine.low %v1122, %v1129
        %v1152 = vunpack.c.l.s4 1983009808
        %v1153 = vunpack.c.0.s8 %v1152
        %v1154 = vlaneseq
        %v1155 = vshrl.u32 %v1154, 7
        %v1156 = vsub.s32 %v1153, %v1155
        %v1157 = vrot.slane %v1150, %v1156
        %v1158 = vcombine.low %v1132, %v1133
        %v1160 = vunpack.c.l.s4 1983009808
        %v1161 = vunpack.c.0.s8 %v1160
        %v1162 = vlaneseq
        %v1163 = vshrl.u32 %v1162, 7
        %v1164 = vsub.s32 %v1161, %v1163
        %v1165 = vrot.slane %v1158, %v1164
        %v1166 = vcombine.low %v1141, %v1149
        %v1167 = vcombine.high %v1141, %v1149
        %v1169 = vunpack.c.l.s4 1934713408
        %v1170 = vunpack.c.0.s8 %v1169
        %v1171 = vlaneseq
        %v1172 = vshrl.u32 %v1171, 7
        %v1173 = vsub.s32 %v1170, %v1172
        %v1174 = vrot.slane %v1166, %v1173
        %v1176 = vunpack.c.l.s4 1934713408
        %v1177 = vunpack.c.0.s8 %v1176
        %v1178 = vlaneseq
        %v1179 = vshrl.u32 %v1178, 7
        %v1180 = vsub.s32 %v1177, %v1179
        %v1181 = vrot.slane %v1167, %v1180
        %v1182 = vcombine.low %v1157, %v1165
        %v1183 = vcombine.high %v1157, %v1165
        %v1185 = vunpack.c.l.s4 1934713408
        %v1186 = vunpack.c.0.s8 %v1185
        %v1187 = vlaneseq
        %v1188 = vshrl.u32 %v1187, 7
        %v1189 = vsub.s32 %v1186, %v1188
        %v1190 = vrot.slane %v1182, %v1189
        %v1192 = vunpack.c.l.s4 1934713408
        %v1193 = vunpack.c.0.s8 %v1192
        %v1194 = vlaneseq
        %v1195 = vshrl.u32 %v1194, 7
        %v1196 = vsub.s32 %v1193, %v1195
        %v1197 = vrot.slane %v1183, %v1196
        %v1198 = vcombine.low %v1174, %v1190
        %v1199 = vcombine.high %v1174, %v1190
        %v1200 = vcombine.low %v1181, %v1197
        %v1201 = vcombine.high %v1181, %v1197
        %1202 = vrot.lane.b32.xlu0 %v903, 64
        %v1203 = vpop.permute.xlu0 %1202
        %1204 = vrot.lane.b32.xlu0 %v910, 64
        %v1205 = vpop.permute.xlu0 %1204
        %1206 = vrot.lane.b32.xlu0 %v913, 64
        %v1207 = vpop.permute.xlu0 %1206
        %1208 = vrot.lane.b32.xlu0 %v916, 64
        %v1209 = vpop.permute.xlu0 %1208
        %v1214 = vcombine.low %v1203, %v1207
        %v1215 = vcombine.high %v1203, %v1207
        %v1217 = vunpack.c.l.s4 1983009808
        %v1218 = vunpack.c.0.s8 %v1217
        %v1219 = vlaneseq
        %v1220 = vshrl.u32 %v1219, 7
        %v1221 = vsub.s32 %v1218, %v1220
        %v1222 = vrot.slane %v1214, %v1221
        %v1224 = vunpack.c.l.s4 1983009808
        %v1225 = vunpack.c.0.s8 %v1224
        %v1226 = vlaneseq
        %v1227 = vshrl.u32 %v1226, 7
        %v1228 = vsub.s32 %v1225, %v1227
        %v1229 = vrot.slane %v1215, %v1228
        %v1230 = vcombine.low %v1205, %v1209
        %v1231 = vcombine.high %v1205, %v1209
        %v1233 = vunpack.c.l.s4 1983009808
        %v1234 = vunpack.c.0.s8 %v1233
        %v1235 = vlaneseq
        %v1236 = vshrl.u32 %v1235, 7
        %v1237 = vsub.s32 %v1234, %v1236
        %v1238 = vrot.slane %v1230, %v1237
        %v1240 = vunpack.c.l.s4 1983009808
        %v1241 = vunpack.c.0.s8 %v1240
        %v1242 = vlaneseq
        %v1243 = vshrl.u32 %v1242, 7
        %v1244 = vsub.s32 %v1241, %v1243
        %v1245 = vrot.slane %v1231, %v1244
        %v1246 = vcombine.low %v1222, %v1238
        %v1247 = vcombine.high %v1222, %v1238
        %v1249 = vunpack.c.l.s4 1934713408
        %v1250 = vunpack.c.0.s8 %v1249
        %v1251 = vlaneseq
        %v1252 = vshrl.u32 %v1251, 7
        %v1253 = vsub.s32 %v1250, %v1252
        %v1254 = vrot.slane %v1246, %v1253
        %v1256 = vunpack.c.l.s4 1934713408
        %v1257 = vunpack.c.0.s8 %v1256
        %v1258 = vlaneseq
        %v1259 = vshrl.u32 %v1258, 7
        %v1260 = vsub.s32 %v1257, %v1259
        %v1261 = vrot.slane %v1247, %v1260
        %v1262 = vcombine.low %v1229, %v1245
        %v1263 = vcombine.high %v1229, %v1245
        %v1265 = vunpack.c.l.s4 1934713408
        %v1266 = vunpack.c.0.s8 %v1265
        %v1267 = vlaneseq
        %v1268 = vshrl.u32 %v1267, 7
        %v1269 = vsub.s32 %v1266, %v1268
        %v1270 = vrot.slane %v1262, %v1269
        %v1272 = vunpack.c.l.s4 1934713408
        %v1273 = vunpack.c.0.s8 %v1272
        %v1274 = vlaneseq
        %v1275 = vshrl.u32 %v1274, 7
        %v1276 = vsub.s32 %v1273, %v1275
        %v1277 = vrot.slane %v1263, %v1276
        %v1278 = vcombine.high %v1254, 0.0
        %v1279 = vcombine.high %v1261, 0.0
        %v1280 = vcombine.high %v1270, 0.0
        %v1281 = vcombine.high %v1277, 0.0
        %v1282 = vcombine.low %v1254, %v1261
        %v1284 = vunpack.c.l.s4 1983009808
        %v1285 = vunpack.c.0.s8 %v1284
        %v1286 = vlaneseq
        %v1287 = vshrl.u32 %v1286, 7
        %v1288 = vsub.s32 %v1285, %v1287
        %v1289 = vrot.slane %v1282, %v1288
        %v1290 = vcombine.low %v1278, %v1279
        %v1292 = vunpack.c.l.s4 1983009808
        %v1293 = vunpack.c.0.s8 %v1292
        %v1294 = vlaneseq
        %v1295 = vshrl.u32 %v1294, 7
        %v1296 = vsub.s32 %v1293, %v1295
        %v1297 = vrot.slane %v1290, %v1296
        %v1298 = vcombine.low %v1270, %v1277
        %v1300 = vunpack.c.l.s4 1983009808
        %v1301 = vunpack.c.0.s8 %v1300
        %v1302 = vlaneseq
        %v1303 = vshrl.u32 %v1302, 7
        %v1304 = vsub.s32 %v1301, %v1303
        %v1305 = vrot.slane %v1298, %v1304
        %v1306 = vcombine.low %v1280, %v1281
        %v1308 = vunpack.c.l.s4 1983009808
        %v1309 = vunpack.c.0.s8 %v1308
        %v1310 = vlaneseq
        %v1311 = vshrl.u32 %v1310, 7
        %v1312 = vsub.s32 %v1309, %v1311
        %v1313 = vrot.slane %v1306, %v1312
        %v1314 = vcombine.low %v1289, %v1297
        %v1315 = vcombine.high %v1289, %v1297
        %v1317 = vunpack.c.l.s4 1934713408
        %v1318 = vunpack.c.0.s8 %v1317
        %v1319 = vlaneseq
        %v1320 = vshrl.u32 %v1319, 7
        %v1321 = vsub.s32 %v1318, %v1320
        %v1322 = vrot.slane %v1314, %v1321
        %v1324 = vunpack.c.l.s4 1934713408
        %v1325 = vunpack.c.0.s8 %v1324
        %v1326 = vlaneseq
        %v1327 = vshrl.u32 %v1326, 7
        %v1328 = vsub.s32 %v1325, %v1327
        %v1329 = vrot.slane %v1315, %v1328
        %v1330 = vcombine.low %v1305, %v1313
        %v1331 = vcombine.high %v1305, %v1313
        %v1333 = vunpack.c.l.s4 1934713408
        %v1334 = vunpack.c.0.s8 %v1333
        %v1335 = vlaneseq
        %v1336 = vshrl.u32 %v1335, 7
        %v1337 = vsub.s32 %v1334, %v1336
        %v1338 = vrot.slane %v1330, %v1337
        %v1340 = vunpack.c.l.s4 1934713408
        %v1341 = vunpack.c.0.s8 %v1340
        %v1342 = vlaneseq
        %v1343 = vshrl.u32 %v1342, 7
        %v1344 = vsub.s32 %v1341, %v1343
        %v1345 = vrot.slane %v1331, %v1344
        %v1346 = vcombine.low %v1322, %v1338
        %v1347 = vcombine.high %v1322, %v1338
        %v1348 = vcombine.low %v1329, %v1345
        %v1349 = vcombine.high %v1329, %v1345
        %v1350 = vpack.c.bf16 %v1050, %v1050
        %v1351 = vpack.c.bf16 %v1051, %v1051
        %v1352 = vpack.c.bf16 %v1052, %v1052
        %v1353 = vpack.c.bf16 %v1053, %v1053
        %v1354 = vpack.c.bf16 %v1198, %v1198
        %v1355 = vpack.c.bf16 %v1199, %v1199
        %v1356 = vpack.c.bf16 %v1200, %v1200
        %v1357 = vpack.c.bf16 %v1201, %v1201
        %vm1358 = vcmask 64512
        %v1360 = vsel %vm1358, %v1350, 0
        %v1363 = vsel %vm1358, %v1354, 0
        %1365 = vmatprep.subr.bf16.mxu0 0
        %1366 = vmatpush1.bf16.xpose.msra.mxu0 %v1363
        %1367 = vmatprep.subr.bf16.mxu0 0
        %1368 = vmatpush1.bf16.xpose.msra.mxu0 0
        %1369 = vmatprep.subr.bf16.mxu0 0
        %1370 = vmatpush1.bf16.xpose.msra.mxu0 0
        %1371 = vmatprep.subr.bf16.mxu0 0
        %1372 = vmatpush1.bf16.xpose.msra.mxu0 0
        %1373 = vmatprep.subr.bf16.mxu0 0
        %1374 = vmatpush1.bf16.xpose.msra.mxu0 0
        %1375 = vmatprep.subr.bf16.mxu0 0
        %1376 = vmatpush1.bf16.xpose.msra.mxu0 0
        %1377 = vmatprep.subr.bf16.mxu0 0
        %1378 = vmatpush1.bf16.xpose.msra.mxu0 0
        %1379 = vmatprep.subr.bf16.mxu0 0
        %1380 = vmatpush1.bf16.xpose.msra.mxu0 0
        %1381 = vmatprep.subr.bf16.mxu0 0
        %1382 = vmatpush1.bf16.xpose.msra.mxu0 0
        %1383 = vmatprep.subr.bf16.mxu0 0
        %1384 = vmatpush1.bf16.xpose.msra.mxu0 0
        %1385 = vmatprep.subr.bf16.mxu0 0
        %1386 = vmatpush1.bf16.xpose.msra.mxu0 0
        %1387 = vmatprep.subr.bf16.mxu0 0
        %1388 = vmatpush1.bf16.xpose.msra.mxu0 0
        %1389 = vmatprep.subr.bf16.mxu0 0
        %1390 = vmatpush1.bf16.xpose.msra.mxu0 0
        %1391 = vmatprep.subr.bf16.mxu0 0
        %1392 = vmatpush1.bf16.xpose.msra.mxu0 0
        %1393 = vmatprep.subr.bf16.mxu0 0
        %1394 = vmatpush1.bf16.xpose.msra.mxu0 0
        %1395 = vmatprep.subr.bf16.mxu0 0
        %1396 = vmatpush1.bf16.xpose.msra.mxu0 0
        %1397 = vmatprep.mubr.bf16.mxu0 0
        %1398 = vmatmul.mubr.bf16.gmra.mrb[0].mxu0 %v1360
        %v1399 = vpop.f32.mrb[0].mxu0
        %v1400 = vadd.f32 0.0, %v1399
        %v1401 = vpop.f32.mrb[0].mxu0
        %v1402 = vpop.f32.mrb[0].mxu0
        %v1403 = vpop.f32.mrb[0].mxu0
        %1404 = vdwg.mxu0
        %v1406 = vsel %vm1358, %v1351, 0
        %v1409 = vsel %vm1358, %v1355, 0
        %1411 = vmatprep.subr.bf16.mxu0 0
        %1412 = vmatpush1.bf16.xpose.msra.mxu0 %v1409
        %1413 = vmatprep.subr.bf16.mxu0 0
        %1414 = vmatpush1.bf16.xpose.msra.mxu0 0
        %1415 = vmatprep.subr.bf16.mxu0 0
        %1416 = vmatpush1.bf16.xpose.msra.mxu0 0
        %1417 = vmatprep.subr.bf16.mxu0 0
        %1418 = vmatpush1.bf16.xpose.msra.mxu0 0
        %1419 = vmatprep.subr.bf16.mxu0 0
        %1420 = vmatpush1.bf16.xpose.msra.mxu0 0
        %1421 = vmatprep.subr.bf16.mxu0 0
        %1422 = vmatpush1.bf16.xpose.msra.mxu0 0
        %1423 = vmatprep.subr.bf16.mxu0 0
        %1424 = vmatpush1.bf16.xpose.msra.mxu0 0
        %1425 = vmatprep.subr.bf16.mxu0 0
        %1426 = vmatpush1.bf16.xpose.msra.mxu0 0
        %1427 = vmatprep.subr.bf16.mxu0 0
        %1428 = vmatpush1.bf16.xpose.msra.mxu0 0
        %1429 = vmatprep.subr.bf16.mxu0 0
        %1430 = vmatpush1.bf16.xpose.msra.mxu0 0
        %1431 = vmatprep.subr.bf16.mxu0 0
        %1432 = vmatpush1.bf16.xpose.msra.mxu0 0
        %1433 = vmatprep.subr.bf16.mxu0 0
        %1434 = vmatpush1.bf16.xpose.msra.mxu0 0
        %1435 = vmatprep.subr.bf16.mxu0 0
        %1436 = vmatpush1.bf16.xpose.msra.mxu0 0
        %1437 = vmatprep.subr.bf16.mxu0 0
        %1438 = vmatpush1.bf16.xpose.msra.mxu0 0
        %1439 = vmatprep.subr.bf16.mxu0 0
        %1440 = vmatpush1.bf16.xpose.msra.mxu0 0
        %1441 = vmatprep.subr.bf16.mxu0 0
        %1442 = vmatpush1.bf16.xpose.msra.mxu0 0
        %1443 = vmatprep.mubr.bf16.mxu0 0
        %1444 = vmatmul.mubr.bf16.gmra.mrb[0].mxu0 %v1406
        %v1445 = vpop.f32.mrb[0].mxu0
        %v1446 = vadd.f32 0.0, %v1445
        %v1447 = vpop.f32.mrb[0].mxu0
        %v1448 = vpop.f32.mrb[0].mxu0
        %v1449 = vpop.f32.mrb[0].mxu0
        %1450 = vdwg.mxu0
        %v1452 = vsel %vm1358, %v1352, 0
        %v1455 = vsel %vm1358, %v1356, 0
        %1457 = vmatprep.subr.bf16.mxu0 0
        %1458 = vmatpush1.bf16.xpose.msra.mxu0 %v1455
        %1459 = vmatprep.subr.bf16.mxu0 0
        %1460 = vmatpush1.bf16.xpose.msra.mxu0 0
        %1461 = vmatprep.subr.bf16.mxu0 0
        %1462 = vmatpush1.bf16.xpose.msra.mxu0 0
        %1463 = vmatprep.subr.bf16.mxu0 0
        %1464 = vmatpush1.bf16.xpose.msra.mxu0 0
        %1465 = vmatprep.subr.bf16.mxu0 0
        %1466 = vmatpush1.bf16.xpose.msra.mxu0 0
        %1467 = vmatprep.subr.bf16.mxu0 0
        %1468 = vmatpush1.bf16.xpose.msra.mxu0 0
        %1469 = vmatprep.subr.bf16.mxu0 0
        %1470 = vmatpush1.bf16.xpose.msra.mxu0 0
        %1471 = vmatprep.subr.bf16.mxu0 0
        %1472 = vmatpush1.bf16.xpose.msra.mxu0 0
        %1473 = vmatprep.subr.bf16.mxu0 0
        %1474 = vmatpush1.bf16.xpose.msra.mxu0 0
        %1475 = vmatprep.subr.bf16.mxu0 0
        %1476 = vmatpush1.bf16.xpose.msra.mxu0 0
        %1477 = vmatprep.subr.bf16.mxu0 0
        %1478 = vmatpush1.bf16.xpose.msra.mxu0 0
        %1479 = vmatprep.subr.bf16.mxu0 0
        %1480 = vmatpush1.bf16.xpose.msra.mxu0 0
        %1481 = vmatprep.subr.bf16.mxu0 0
        %1482 = vmatpush1.bf16.xpose.msra.mxu0 0
        %1483 = vmatprep.subr.bf16.mxu0 0
        %1484 = vmatpush1.bf16.xpose.msra.mxu0 0
        %1485 = vmatprep.subr.bf16.mxu0 0
        %1486 = vmatpush1.bf16.xpose.msra.mxu0 0
        %1487 = vmatprep.subr.bf16.mxu0 0
        %1488 = vmatpush1.bf16.xpose.msra.mxu0 0
        %1489 = vmatprep.mubr.bf16.mxu0 0
        %1490 = vmatmul.mubr.bf16.gmra.mrb[0].mxu0 %v1452
        %v1491 = vpop.f32.mrb[0].mxu0
        %v1492 = vadd.f32 0.0, %v1491
        %v1493 = vpop.f32.mrb[0].mxu0
        %v1494 = vpop.f32.mrb[0].mxu0
        %v1495 = vpop.f32.mrb[0].mxu0
        %1496 = vdwg.mxu0
        %v1498 = vsel %vm1358, %v1353, 0
        %v1501 = vsel %vm1358, %v1357, 0
        %1503 = vmatprep.subr.bf16.mxu0 0
        %1504 = vmatpush1.bf16.xpose.msra.mxu0 %v1501
        %1505 = vmatprep.subr.bf16.mxu0 0
        %1506 = vmatpush1.bf16.xpose.msra.mxu0 0
        %1507 = vmatprep.subr.bf16.mxu0 0
        %1508 = vmatpush1.bf16.xpose.msra.mxu0 0
        %1509 = vmatprep.subr.bf16.mxu0 0
        %1510 = vmatpush1.bf16.xpose.msra.mxu0 0
        %1511 = vmatprep.subr.bf16.mxu0 0
        %1512 = vmatpush1.bf16.xpose.msra.mxu0 0
        %1513 = vmatprep.subr.bf16.mxu0 0
        %1514 = vmatpush1.bf16.xpose.msra.mxu0 0
        %1515 = vmatprep.subr.bf16.mxu0 0
        %1516 = vmatpush1.bf16.xpose.msra.mxu0 0
        %1517 = vmatprep.subr.bf16.mxu0 0
        %1518 = vmatpush1.bf16.xpose.msra.mxu0 0
        %1519 = vmatprep.subr.bf16.mxu0 0
        %1520 = vmatpush1.bf16.xpose.msra.mxu0 0
        %1521 = vmatprep.subr.bf16.mxu0 0
        %1522 = vmatpush1.bf16.xpose.msra.mxu0 0
        %1523 = vmatprep.subr.bf16.mxu0 0
        %1524 = vmatpush1.bf16.xpose.msra.mxu0 0
        %1525 = vmatprep.subr.bf16.mxu0 0
        %1526 = vmatpush1.bf16.xpose.msra.mxu0 0
        %1527 = vmatprep.subr.bf16.mxu0 0
        %1528 = vmatpush1.bf16.xpose.msra.mxu0 0
        %1529 = vmatprep.subr.bf16.mxu0 0
        %1530 = vmatpush1.bf16.xpose.msra.mxu0 0
        %1531 = vmatprep.subr.bf16.mxu0 0
        %1532 = vmatpush1.bf16.xpose.msra.mxu0 0
        %1533 = vmatprep.subr.bf16.mxu0 0
        %1534 = vmatpush1.bf16.xpose.msra.mxu0 0
        %1535 = vmatprep.mubr.bf16.mxu0 0
        %1536 = vmatmul.mubr.bf16.gmra.mrb[0].mxu0 %v1498
        %v1537 = vpop.f32.mrb[0].mxu0
        %v1538 = vadd.f32 0.0, %v1537
        %v1539 = vpop.f32.mrb[0].mxu0
        %v1540 = vpop.f32.mrb[0].mxu0
        %v1541 = vpop.f32.mrb[0].mxu0
        %1542 = vdwg.mxu0
        %v1543 = vmul.f32 %v1400, 0.35355338
        %v1544 = vmul.f32 %v1446, 0.35355338
        %v1545 = vmul.f32 %v1492, 0.35355338
        %v1546 = vmul.f32 %v1538, 0.35355338
        %v1548 = vlaneseq
        %v1549 = vshrl.u32 %v1548, 7
        %v1550 = vsub.s32 0, %v1549
        %v1551 = vrot.slane %v801, %v1550
        %v1553 = vadd.f32 %v1543, %v1551
        %v1554 = vadd.f32 %v1544, %v1551
        %v1555 = vadd.f32 %v1545, %v1551
        %v1556 = vadd.f32 %v1546, %v1551
        %v1557 = vsel %vm1358, %v1553, -inf
        %1558 = vmax.xlane.f32.xlu0 %v1557
        %v1559 = vpop.xlane.xlu0 %1558
        %v1560 = vsel %vm1358, %v1554, -inf
        %1561 = vmax.xlane.f32.xlu0 %v1560
        %v1562 = vpop.xlane.xlu0 %1561
        %v1563 = vsel %vm1358, %v1555, -inf
        %1564 = vmax.xlane.f32.xlu0 %v1563
        %v1565 = vpop.xlane.xlu0 %1564
        %v1566 = vsel %vm1358, %v1556, -inf
        %1567 = vmax.xlane.f32.xlu0 %v1566
        %v1568 = vpop.xlane.xlu0 %1567
        %v1569 = vsub.f32 %v1553, %v1559
        %v1570 = vsub.f32 %v1554, %v1562
        %v1571 = vsub.f32 %v1555, %v1565
        %v1572 = vsub.f32 %v1556, %v1568
        %v1573 = vmul.f32 %v1569, 1.442695
        %v1574 = vpow.pop %v1573
        %v1575 = vmul.f32 %v1570, 1.442695
        %v1576 = vpow.pop %v1575
        %v1577 = vmul.f32 %v1571, 1.442695
        %v1578 = vpow.pop %v1577
        %v1579 = vmul.f32 %v1572, 1.442695
        %v1580 = vpow.pop %v1579
        %v1581 = vsel %vm1358, %v1574, 0.0
        %1582 = vadd.xlane.f32.xlu0 %v1581
        %v1583 = vpop.xlane.xlu0 %1582
        %v1584 = vsel %vm1358, %v1576, 0.0
        %1585 = vadd.xlane.f32.xlu0 %v1584
        %v1586 = vpop.xlane.xlu0 %1585
        %v1587 = vsel %vm1358, %v1578, 0.0
        %1588 = vadd.xlane.f32.xlu0 %v1587
        %v1589 = vpop.xlane.xlu0 %1588
        %v1590 = vsel %vm1358, %v1580, 0.0
        %1591 = vadd.xlane.f32.xlu0 %v1590
        %v1592 = vpop.xlane.xlu0 %1591
        %v1593 = vrcp.pop %v1583
        %v1594 = vrcp.pop %v1586
        %v1595 = vrcp.pop %v1589
        %v1596 = vrcp.pop %v1592
        %v1597 = vmul.f32 %v1574, %v1593
        %v1598 = vmul.f32 %v1576, %v1594
        %v1599 = vmul.f32 %v1578, %v1595
        %v1600 = vmul.f32 %v1580, %v1596
        %v1601 = vpack.c.bf16 %v1597, %v1597
        %v1602 = vpack.c.bf16 %v1598, %v1598
        %v1603 = vpack.c.bf16 %v1599, %v1599
        %v1604 = vpack.c.bf16 %v1600, %v1600
        %v1605 = vpack.c.bf16 %v1346, %v1346
        %v1606 = vpack.c.bf16 %v1347, %v1347
        %v1607 = vpack.c.bf16 %v1348, %v1348
        %v1608 = vpack.c.bf16 %v1349, %v1349
        %v1610 = vsel %vm1358, %v1601, 0
        %vm1612 = vcmask 1043456
        %v1614 = vsel %vm1612, %v1605, 0
        %1616 = vmatprep.subr.bf16.mxu0 0
        %1617 = vmatpush1.bf16.msra.mxu0 %v1614
        %1618 = vmatprep.subr.bf16.mxu0 0
        %1619 = vmatpush1.bf16.msra.mxu0 0
        %1620 = vmatprep.subr.bf16.mxu0 0
        %1621 = vmatpush1.bf16.msra.mxu0 0
        %1622 = vmatprep.subr.bf16.mxu0 0
        %1623 = vmatpush1.bf16.msra.mxu0 0
        %1624 = vmatprep.subr.bf16.mxu0 0
        %1625 = vmatpush1.bf16.msra.mxu0 0
        %1626 = vmatprep.subr.bf16.mxu0 0
        %1627 = vmatpush1.bf16.msra.mxu0 0
        %1628 = vmatprep.subr.bf16.mxu0 0
        %1629 = vmatpush1.bf16.msra.mxu0 0
        %1630 = vmatprep.subr.bf16.mxu0 0
        %1631 = vmatpush1.bf16.msra.mxu0 0
        %1632 = vmatprep.subr.bf16.mxu0 0
        %1633 = vmatpush1.bf16.msra.mxu0 0
        %1634 = vmatprep.subr.bf16.mxu0 0
        %1635 = vmatpush1.bf16.msra.mxu0 0
        %1636 = vmatprep.subr.bf16.mxu0 0
        %1637 = vmatpush1.bf16.msra.mxu0 0
        %1638 = vmatprep.subr.bf16.mxu0 0
        %1639 = vmatpush1.bf16.msra.mxu0 0
        %1640 = vmatprep.subr.bf16.mxu0 0
        %1641 = vmatpush1.bf16.msra.mxu0 0
        %1642 = vmatprep.subr.bf16.mxu0 0
        %1643 = vmatpush1.bf16.msra.mxu0 0
        %1644 = vmatprep.subr.bf16.mxu0 0
        %1645 = vmatpush1.bf16.msra.mxu0 0
        %1646 = vmatprep.subr.bf16.mxu0 0
        %1647 = vmatpush1.bf16.msra.mxu0 0
        %1648 = vmatprep.mubr.bf16.mxu0 0
        %1649 = vmatmul.mubr.bf16.gmra.mrb[0].mxu0 %v1610
        %v1650 = vpop.f32.mrb[0].mxu0
        %v1651 = vadd.f32 0.0, %v1650
        %v1652 = vpop.f32.mrb[0].mxu0
        %v1653 = vpop.f32.mrb[0].mxu0
        %v1654 = vpop.f32.mrb[0].mxu0
        %1655 = vdwg.mxu0
        %v1657 = vsel %vm1358, %v1602, 0
        %v1660 = vsel %vm1612, %v1606, 0
        %1662 = vmatprep.subr.bf16.mxu0 0
        %1663 = vmatpush1.bf16.msra.mxu0 %v1660
        %1664 = vmatprep.subr.bf16.mxu0 0
        %1665 = vmatpush1.bf16.msra.mxu0 0
        %1666 = vmatprep.subr.bf16.mxu0 0
        %1667 = vmatpush1.bf16.msra.mxu0 0
        %1668 = vmatprep.subr.bf16.mxu0 0
        %1669 = vmatpush1.bf16.msra.mxu0 0
        %1670 = vmatprep.subr.bf16.mxu0 0
        %1671 = vmatpush1.bf16.msra.mxu0 0
        %1672 = vmatprep.subr.bf16.mxu0 0
        %1673 = vmatpush1.bf16.msra.mxu0 0
        %1674 = vmatprep.subr.bf16.mxu0 0
        %1675 = vmatpush1.bf16.msra.mxu0 0
        %1676 = vmatprep.subr.bf16.mxu0 0
        %1677 = vmatpush1.bf16.msra.mxu0 0
        %1678 = vmatprep.subr.bf16.mxu0 0
        %1679 = vmatpush1.bf16.msra.mxu0 0
        %1680 = vmatprep.subr.bf16.mxu0 0
        %1681 = vmatpush1.bf16.msra.mxu0 0
        %1682 = vmatprep.subr.bf16.mxu0 0
        %1683 = vmatpush1.bf16.msra.mxu0 0
        %1684 = vmatprep.subr.bf16.mxu0 0
        %1685 = vmatpush1.bf16.msra.mxu0 0
        %1686 = vmatprep.subr.bf16.mxu0 0
        %1687 = vmatpush1.bf16.msra.mxu0 0
        %1688 = vmatprep.subr.bf16.mxu0 0
        %1689 = vmatpush1.bf16.msra.mxu0 0
        %1690 = vmatprep.subr.bf16.mxu0 0
        %1691 = vmatpush1.bf16.msra.mxu0 0
        %1692 = vmatprep.subr.bf16.mxu0 0
        %1693 = vmatpush1.bf16.msra.mxu0 0
        %1694 = vmatprep.mubr.bf16.mxu0 0
        %1695 = vmatmul.mubr.bf16.gmra.mrb[0].mxu0 %v1657
        %v1696 = vpop.f32.mrb[0].mxu0
        %v1697 = vadd.f32 0.0, %v1696
        %v1698 = vpop.f32.mrb[0].mxu0
        %v1699 = vpop.f32.mrb[0].mxu0
        %v1700 = vpop.f32.mrb[0].mxu0
        %1701 = vdwg.mxu0
        %v1703 = vsel %vm1358, %v1603, 0
        %v1706 = vsel %vm1612, %v1607, 0
        %1708 = vmatprep.subr.bf16.mxu0 0
        %1709 = vmatpush1.bf16.msra.mxu0 %v1706
        %1710 = vmatprep.subr.bf16.mxu0 0
        %1711 = vmatpush1.bf16.msra.mxu0 0
        %1712 = vmatprep.subr.bf16.mxu0 0
        %1713 = vmatpush1.bf16.msra.mxu0 0
        %1714 = vmatprep.subr.bf16.mxu0 0
        %1715 = vmatpush1.bf16.msra.mxu0 0
        %1716 = vmatprep.subr.bf16.mxu0 0
        %1717 = vmatpush1.bf16.msra.mxu0 0
        %1718 = vmatprep.subr.bf16.mxu0 0
        %1719 = vmatpush1.bf16.msra.mxu0 0
        %1720 = vmatprep.subr.bf16.mxu0 0
        %1721 = vmatpush1.bf16.msra.mxu0 0
        %1722 = vmatprep.subr.bf16.mxu0 0
        %1723 = vmatpush1.bf16.msra.mxu0 0
        %1724 = vmatprep.subr.bf16.mxu0 0
        %1725 = vmatpush1.bf16.msra.mxu0 0
        %1726 = vmatprep.subr.bf16.mxu0 0
        %1727 = vmatpush1.bf16.msra.mxu0 0
        %1728 = vmatprep.subr.bf16.mxu0 0
        %1729 = vmatpush1.bf16.msra.mxu0 0
        %1730 = vmatprep.subr.bf16.mxu0 0
        %1731 = vmatpush1.bf16.msra.mxu0 0
        %1732 = vmatprep.subr.bf16.mxu0 0
        %1733 = vmatpush1.bf16.msra.mxu0 0
        %1734 = vmatprep.subr.bf16.mxu0 0
        %1735 = vmatpush1.bf16.msra.mxu0 0
        %1736 = vmatprep.subr.bf16.mxu0 0
        %1737 = vmatpush1.bf16.msra.mxu0 0
        %1738 = vmatprep.subr.bf16.mxu0 0
        %1739 = vmatpush1.bf16.msra.mxu0 0
        %1740 = vmatprep.mubr.bf16.mxu0 0
        %1741 = vmatmul.mubr.bf16.gmra.mrb[0].mxu0 %v1703
        %v1742 = vpop.f32.mrb[0].mxu0
        %v1743 = vadd.f32 0.0, %v1742
        %v1744 = vpop.f32.mrb[0].mxu0
        %v1745 = vpop.f32.mrb[0].mxu0
        %v1746 = vpop.f32.mrb[0].mxu0
        %1747 = vdwg.mxu0
        %v1749 = vsel %vm1358, %v1604, 0
        %v1752 = vsel %vm1612, %v1608, 0
        %1754 = vmatprep.subr.bf16.mxu0 0
        %1755 = vmatpush1.bf16.msra.mxu0 %v1752
        %1756 = vmatprep.subr.bf16.mxu0 0
        %1757 = vmatpush1.bf16.msra.mxu0 0
        %1758 = vmatprep.subr.bf16.mxu0 0
        %1759 = vmatpush1.bf16.msra.mxu0 0
        %1760 = vmatprep.subr.bf16.mxu0 0
        %1761 = vmatpush1.bf16.msra.mxu0 0
        %1762 = vmatprep.subr.bf16.mxu0 0
        %1763 = vmatpush1.bf16.msra.mxu0 0
        %1764 = vmatprep.subr.bf16.mxu0 0
        %1765 = vmatpush1.bf16.msra.mxu0 0
        %1766 = vmatprep.subr.bf16.mxu0 0
        %1767 = vmatpush1.bf16.msra.mxu0 0
        %1768 = vmatprep.subr.bf16.mxu0 0
        %1769 = vmatpush1.bf16.msra.mxu0 0
        %1770 = vmatprep.subr.bf16.mxu0 0
        %1771 = vmatpush1.bf16.msra.mxu0 0
        %1772 = vmatprep.subr.bf16.mxu0 0
        %1773 = vmatpush1.bf16.msra.mxu0 0
        %1774 = vmatprep.subr.bf16.mxu0 0
        %1775 = vmatpush1.bf16.msra.mxu0 0
        %1776 = vmatprep.subr.bf16.mxu0 0
        %1777 = vmatpush1.bf16.msra.mxu0 0
        %1778 = vmatprep.subr.bf16.mxu0 0
        %1779 = vmatpush1.bf16.msra.mxu0 0
        %1780 = vmatprep.subr.bf16.mxu0 0
        %1781 = vmatpush1.bf16.msra.mxu0 0
        %1782 = vmatprep.subr.bf16.mxu0 0
        %1783 = vmatpush1.bf16.msra.mxu0 0
        %1784 = vmatprep.subr.bf16.mxu0 0
        %1785 = vmatpush1.bf16.msra.mxu0 0
        %1786 = vmatprep.mubr.bf16.mxu0 0
        %1787 = vmatmul.mubr.bf16.gmra.mrb[0].mxu0 %v1749
        %v1788 = vpop.f32.mrb[0].mxu0
        %v1789 = vadd.f32 0.0, %v1788
        %v1790 = vpop.f32.mrb[0].mxu0
        %v1791 = vpop.f32.mrb[0].mxu0
        %v1792 = vpop.f32.mrb[0].mxu0
        %1793 = vdwg.mxu0
        %v1794 = vcombine.low %v1651, %v1743
        %v1795 = vcombine.high %v1651, %v1743
        %v1797 = vunpack.c.l.s4 1983009808
        %v1798 = vunpack.c.0.s8 %v1797
        %v1799 = vlaneseq
        %v1800 = vshrl.u32 %v1799, 7
        %v1801 = vsub.s32 %v1798, %v1800
        %v1802 = vrot.slane %v1794, %v1801
        %v1804 = vunpack.c.l.s4 1983009808
        %v1805 = vunpack.c.0.s8 %v1804
        %v1806 = vlaneseq
        %v1807 = vshrl.u32 %v1806, 7
        %v1808 = vsub.s32 %v1805, %v1807
        %v1809 = vrot.slane %v1795, %v1808
        %v1810 = vcombine.low %v1697, %v1789
        %v1811 = vcombine.high %v1697, %v1789
        %v1813 = vunpack.c.l.s4 1983009808
        %v1814 = vunpack.c.0.s8 %v1813
        %v1815 = vlaneseq
        %v1816 = vshrl.u32 %v1815, 7
        %v1817 = vsub.s32 %v1814, %v1816
        %v1818 = vrot.slane %v1810, %v1817
        %v1820 = vunpack.c.l.s4 1983009808
        %v1821 = vunpack.c.0.s8 %v1820
        %v1822 = vlaneseq
        %v1823 = vshrl.u32 %v1822, 7
        %v1824 = vsub.s32 %v1821, %v1823
        %v1825 = vrot.slane %v1811, %v1824
        %v1826 = vcombine.low %v1802, %v1818
        %v1827 = vcombine.high %v1802, %v1818
        %v1829 = vunpack.c.l.s4 1934713408
        %v1830 = vunpack.c.0.s8 %v1829
        %v1831 = vlaneseq
        %v1832 = vshrl.u32 %v1831, 7
        %v1833 = vsub.s32 %v1830, %v1832
        %v1834 = vrot.slane %v1826, %v1833
        %v1836 = vunpack.c.l.s4 1934713408
        %v1837 = vunpack.c.0.s8 %v1836
        %v1838 = vlaneseq
        %v1839 = vshrl.u32 %v1838, 7
        %v1840 = vsub.s32 %v1837, %v1839
        %v1841 = vrot.slane %v1827, %v1840
        %v1842 = vcombine.low %v1809, %v1825
        %v1843 = vcombine.high %v1809, %v1825
        %v1845 = vunpack.c.l.s4 1934713408
        %v1846 = vunpack.c.0.s8 %v1845
        %v1847 = vlaneseq
        %v1848 = vshrl.u32 %v1847, 7
        %v1849 = vsub.s32 %v1846, %v1848
        %v1850 = vrot.slane %v1842, %v1849
        %v1852 = vunpack.c.l.s4 1934713408
        %v1853 = vunpack.c.0.s8 %v1852
        %v1854 = vlaneseq
        %v1855 = vshrl.u32 %v1854, 7
        %v1856 = vsub.s32 %v1853, %v1855
        %v1857 = vrot.slane %v1843, %v1856
        %v1858 = vcombine.high %v1834, 0.0
        %v1859 = vcombine.high %v1841, 0.0
        %v1860 = vcombine.high %v1850, 0.0
        %v1861 = vcombine.high %v1857, 0.0
        %v1862 = vcombine.low %v1834, %v1841
        %v1864 = vunpack.c.l.s4 1983009808
        %v1865 = vunpack.c.0.s8 %v1864
        %v1866 = vlaneseq
        %v1867 = vshrl.u32 %v1866, 7
        %v1868 = vsub.s32 %v1865, %v1867
        %v1869 = vrot.slane %v1862, %v1868
        %v1870 = vcombine.low %v1858, %v1859
        %v1872 = vunpack.c.l.s4 1983009808
        %v1873 = vunpack.c.0.s8 %v1872
        %v1874 = vlaneseq
        %v1875 = vshrl.u32 %v1874, 7
        %v1876 = vsub.s32 %v1873, %v1875
        %v1877 = vrot.slane %v1870, %v1876
        %v1878 = vcombine.low %v1850, %v1857
        %v1880 = vunpack.c.l.s4 1983009808
        %v1881 = vunpack.c.0.s8 %v1880
        %v1882 = vlaneseq
        %v1883 = vshrl.u32 %v1882, 7
        %v1884 = vsub.s32 %v1881, %v1883
        %v1885 = vrot.slane %v1878, %v1884
        %v1886 = vcombine.low %v1860, %v1861
        %v1888 = vunpack.c.l.s4 1983009808
        %v1889 = vunpack.c.0.s8 %v1888
        %v1890 = vlaneseq
        %v1891 = vshrl.u32 %v1890, 7
        %v1892 = vsub.s32 %v1889, %v1891
        %v1893 = vrot.slane %v1886, %v1892
        %v1894 = vcombine.low %v1869, %v1877
        %v1895 = vcombine.high %v1869, %v1877
        %v1897 = vunpack.c.l.s4 1934713408
        %v1898 = vunpack.c.0.s8 %v1897
        %v1899 = vlaneseq
        %v1900 = vshrl.u32 %v1899, 7
        %v1901 = vsub.s32 %v1898, %v1900
        %v1902 = vrot.slane %v1894, %v1901
        %v1904 = vunpack.c.l.s4 1934713408
        %v1905 = vunpack.c.0.s8 %v1904
        %v1906 = vlaneseq
        %v1907 = vshrl.u32 %v1906, 7
        %v1908 = vsub.s32 %v1905, %v1907
        %v1909 = vrot.slane %v1895, %v1908
        %v1910 = vcombine.low %v1885, %v1893
        %v1911 = vcombine.high %v1885, %v1893
        %v1913 = vunpack.c.l.s4 1934713408
        %v1914 = vunpack.c.0.s8 %v1913
        %v1915 = vlaneseq
        %v1916 = vshrl.u32 %v1915, 7
        %v1917 = vsub.s32 %v1914, %v1916
        %v1918 = vrot.slane %v1910, %v1917
        %v1920 = vunpack.c.l.s4 1934713408
        %v1921 = vunpack.c.0.s8 %v1920
        %v1922 = vlaneseq
        %v1923 = vshrl.u32 %v1922, 7
        %v1924 = vsub.s32 %v1921, %v1923
        %v1925 = vrot.slane %v1911, %v1924
        %v1926 = vcombine.low %v1902, %v1918
        %v1927 = vcombine.high %v1902, %v1918
        %v1928 = vcombine.low %v1909, %v1925
        %v1929 = vcombine.high %v1909, %v1925
        %1931 = vrot.lane.b32.xlu0 %v1927, 8
        %v1932 = vpop.permute.xlu0 %1931
        %1935 = vrot.lane.b32.xlu0 %v1928, 16
        %v1936 = vpop.permute.xlu0 %1935
        %1939 = vrot.lane.b32.xlu0 %v1929, 24
        %v1940 = vpop.permute.xlu0 %1939
        %v1942 = vsel %vm1358, %v1926, %v1932
        %vm1943 = vcmask 130048
        %v1944 = vsel %vm1943, %v1942, %v1936
        %vm1945 = vcmask 195584
        %v1946 = vsel %vm1945, %v1944, %v1940
        %v1947 = vpack.c.bf16 %v1946, %v1946
        %v1948 = vld [vmem:[%s772] sm:$0xf]
        %v1949 = vld [vmem:[%s772 + $0x4] sm:$0xf]
        %v1950 = vld [vmem:[%s772 + $0x8] sm:$0xf]
        %v1951 = vld [vmem:[%s772 + $0xc] sm:$0xf]
        %v1952 = vld [vmem:[%s775] sm:$0x1]
        %v1954 = vlaneseq
        %v1955 = vshrl.u32 %v1954, 7
        %v1956 = vsub.s32 0, %v1955
        %v1957 = vrot.slane %v1952, %v1956
        %v1963 = vunpack.c.l.b16 %v1948
        %v1964 = vunpack.c.l.b16 %v1949
        %v1965 = vunpack.c.l.b16 %v1950
        %v1966 = vunpack.c.l.b16 %v1951
        %v1967 = vpack.c.b16 %v1964, %v1963
        %v1968 = vpack.c.b16 %v1966, %v1965
        %v1972 = vsel %vm804, %v1947, 0
        %1974 = vmatprep.subr.bf16.mxu0 0
        %1975 = vmatpush1.bf16.msra.mxu0 %v1967
        %1976 = vmatprep.subr.bf16.mxu0 0
        %1977 = vmatpush1.bf16.msra.mxu0 %v1968
        %1978 = vmatprep.subr.bf16.mxu0 0
        %1979 = vmatpush1.bf16.msra.mxu0 0
        %1980 = vmatprep.subr.bf16.mxu0 0
        %1981 = vmatpush1.bf16.msra.mxu0 0
        %1982 = vmatprep.subr.bf16.mxu0 0
        %1983 = vmatpush1.bf16.msra.mxu0 0
        %1984 = vmatprep.subr.bf16.mxu0 0
        %1985 = vmatpush1.bf16.msra.mxu0 0
        %1986 = vmatprep.subr.bf16.mxu0 0
        %1987 = vmatpush1.bf16.msra.mxu0 0
        %1988 = vmatprep.subr.bf16.mxu0 0
        %1989 = vmatpush1.bf16.msra.mxu0 0
        %1990 = vmatprep.subr.bf16.mxu0 0
        %1991 = vmatpush1.bf16.msra.mxu0 0
        %1992 = vmatprep.subr.bf16.mxu0 0
        %1993 = vmatpush1.bf16.msra.mxu0 0
        %1994 = vmatprep.subr.bf16.mxu0 0
        %1995 = vmatpush1.bf16.msra.mxu0 0
        %1996 = vmatprep.subr.bf16.mxu0 0
        %1997 = vmatpush1.bf16.msra.mxu0 0
        %1998 = vmatprep.subr.bf16.mxu0 0
        %1999 = vmatpush1.bf16.msra.mxu0 0
        %2000 = vmatprep.subr.bf16.mxu0 0
        %2001 = vmatpush1.bf16.msra.mxu0 0
        %2002 = vmatprep.subr.bf16.mxu0 0
        %2003 = vmatpush1.bf16.msra.mxu0 0
        %2004 = vmatprep.subr.bf16.mxu0 0
        %2005 = vmatpush1.bf16.msra.mxu0 0
        %2006 = vmatprep.mubr.bf16.mxu0 0
        %2007 = vmatmul.mubr.bf16.gmra.mrb[0].mxu0 %v1972
        %v2008 = vpop.f32.mrb[0].mxu0
        %v2009 = vadd.f32 %v1957, %v2008
        %v2010 = vpop.f32.mrb[0].mxu0
        %v2011 = vpop.f32.mrb[0].mxu0
        %v2012 = vpop.f32.mrb[0].mxu0
        %2013 = vdwg.mxu0
        %v2014 = vadd.f32 %v800, %v2009
        %v2015 = vld [vmem:[%s778] sm:$0x1]
        %v2016 = vld [vmem:[%s645] sm:$0x1]
        %v2017 = vsel %vm804, %v2014, 0.0
        %2018 = vadd.xlane.f32.xlu0 %v2017
        %v2019 = vpop.xlane.xlu0 %2018
        %v2020 = vmul.f32 %v2019, %v808
        %v2021 = vsub.f32 %v2014, %v2020
        %v2022 = vmul.f32 %v2021, %v2021
        %v2023 = vsel %vm804, %v2022, 0.0
        %2024 = vadd.xlane.f32.xlu0 %v2023
        %v2025 = vpop.xlane.xlu0 %2024
        %v2026 = vmul.f32 %v2025, %v815
        %v2027 = vrsqrt.pop %v2026
        %v2028 = vmul.f32 %v2026, %v2027
        %vm2029 = vcmp.eq.f32.partialorder %v2026, inf
        %v2030 = vsel %vm2029, %v2026, %v2028
        %vm2031 = vcmp.eq.f32.partialorder %v2026, 0.0
        %v2032 = vand.u32 %v2026, 2147483648
        %v2033 = vsel %vm2031, %v2032, %v2030
        %v2034 = vadd.f32 %v2033, 1e-06
        %v2035 = vrcp.pop %v2034
        %v2037 = vlaneseq
        %v2038 = vshrl.u32 %v2037, 7
        %v2039 = vsub.s32 0, %v2038
        %v2040 = vrot.slane %v2015, %v2039
        %v2042 = vmul.f32 %v2040, %v2021
        %v2043 = vmul.f32 %v2042, %v2035
        %v2045 = vlaneseq
        %v2046 = vshrl.u32 %v2045, 7
        %v2047 = vsub.s32 0, %v2046
        %v2048 = vrot.slane %v2016, %v2047
        %v2050 = vadd.f32 %v2043, %v2048
        %v2051 = vpack.c.bf16 %v2050, %v2050
        %v2052 = vld [vmem:[%s783] sm:$0xf]
        %v2053 = vld [vmem:[%s783 + $0x4] sm:$0xf]
        %v2054 = vld [vmem:[%s783 + $0x8] sm:$0xf]
        %v2055 = vld [vmem:[%s783 + $0xc] sm:$0xf]
        %v2056 = vld [vmem:[%s653] sm:$0x1]
        %v2058 = vlaneseq
        %v2059 = vshrl.u32 %v2058, 7
        %v2060 = vsub.s32 0, %v2059
        %v2061 = vrot.slane %v2056, %v2060
        %v2067 = vunpack.c.l.b16 %v2052
        %v2068 = vunpack.c.l.b16 %v2053
        %v2069 = vunpack.c.l.b16 %v2054
        %v2070 = vunpack.c.l.b16 %v2055
        %v2071 = vpack.c.b16 %v2068, %v2067
        %v2072 = vpack.c.b16 %v2070, %v2069
        %v2076 = vsel %vm804, %v2051, 0
        %2078 = vmatprep.subr.bf16.mxu0 0
        %2079 = vmatpush1.bf16.msra.mxu0 %v2071
        %2080 = vmatprep.subr.bf16.mxu0 0
        %2081 = vmatpush1.bf16.msra.mxu0 %v2072
        %2082 = vmatprep.subr.bf16.mxu0 0
        %2083 = vmatpush1.bf16.msra.mxu0 0
        %2084 = vmatprep.subr.bf16.mxu0 0
        %2085 = vmatpush1.bf16.msra.mxu0 0
        %2086 = vmatprep.subr.bf16.mxu0 0
        %2087 = vmatpush1.bf16.msra.mxu0 0
        %2088 = vmatprep.subr.bf16.mxu0 0
        %2089 = vmatpush1.bf16.msra.mxu0 0
        %2090 = vmatprep.subr.bf16.mxu0 0
        %2091 = vmatpush1.bf16.msra.mxu0 0
        %2092 = vmatprep.subr.bf16.mxu0 0
        %2093 = vmatpush1.bf16.msra.mxu0 0
        %2094 = vmatprep.subr.bf16.mxu0 0
        %2095 = vmatpush1.bf16.msra.mxu0 0
        %2096 = vmatprep.subr.bf16.mxu0 0
        %2097 = vmatpush1.bf16.msra.mxu0 0
        %2098 = vmatprep.subr.bf16.mxu0 0
        %2099 = vmatpush1.bf16.msra.mxu0 0
        %2100 = vmatprep.subr.bf16.mxu0 0
        %2101 = vmatpush1.bf16.msra.mxu0 0
        %2102 = vmatprep.subr.bf16.mxu0 0
        %2103 = vmatpush1.bf16.msra.mxu0 0
        %2104 = vmatprep.subr.bf16.mxu0 0
        %2105 = vmatpush1.bf16.msra.mxu0 0
        %2106 = vmatprep.subr.bf16.mxu0 0
        %2107 = vmatpush1.bf16.msra.mxu0 0
        %2108 = vmatprep.subr.bf16.mxu0 0
        %2109 = vmatpush1.bf16.msra.mxu0 0
        %2110 = vmatprep.mubr.bf16.mxu0 0
        %2111 = vmatmul.mubr.bf16.gmra.mrb[0].mxu0 %v2076
        %v2112 = vpop.f32.mrb[0].mxu0
        %v2113 = vadd.f32 %v2061, %v2112
        %v2114 = vpop.f32.mrb[0].mxu0
        %v2115 = vpop.f32.mrb[0].mxu0
        %v2116 = vpop.f32.mrb[0].mxu0
        %2117 = vdwg.mxu0
        %v2118 = vmax.f32 %v2113, 0.0
        %v2119 = vpack.c.bf16 %v2118, %v2118
        %v2120 = vld [vmem:[%s788] sm:$0xf]
        %v2121 = vld [vmem:[%s788 + $0x4] sm:$0xf]
        %v2122 = vld [vmem:[%s788 + $0x8] sm:$0xf]
        %v2123 = vld [vmem:[%s788 + $0xc] sm:$0xf]
        %v2124 = vld [vmem:[%s788 + $0x10] sm:$0xf]
        %v2125 = vld [vmem:[%s788 + $0x14] sm:$0xf]
        %v2126 = vld [vmem:[%s788 + $0x18] sm:$0xf]
        %v2127 = vld [vmem:[%s788 + $0x1c] sm:$0xf]
        %v2128 = vld [vmem:[%s791] sm:$0x1]
        %v2130 = vlaneseq
        %v2131 = vshrl.u32 %v2130, 7
        %v2132 = vsub.s32 0, %v2131
        %v2133 = vrot.slane %v2128, %v2132
        %v2143 = vunpack.c.l.b16 %v2120
        %v2144 = vunpack.c.l.b16 %v2121
        %v2145 = vunpack.c.l.b16 %v2122
        %v2146 = vunpack.c.l.b16 %v2123
        %v2147 = vunpack.c.l.b16 %v2124
        %v2148 = vunpack.c.l.b16 %v2125
        %v2149 = vunpack.c.l.b16 %v2126
        %v2150 = vunpack.c.l.b16 %v2127
        %v2151 = vpack.c.b16 %v2144, %v2143
        %v2152 = vpack.c.b16 %v2146, %v2145
        %v2153 = vpack.c.b16 %v2148, %v2147
        %v2154 = vpack.c.b16 %v2150, %v2149
        %vm2159 = vcmask 523264
        %v2161 = vsel %vm2159, %v2119, 0
        %2163 = vmatprep.subr.bf16.mxu0 0
        %2164 = vmatpush1.bf16.msra.mxu0 %v2151
        %2165 = vmatprep.subr.bf16.mxu0 0
        %2166 = vmatpush1.bf16.msra.mxu0 %v2152
        %2167 = vmatprep.subr.bf16.mxu0 0
        %2168 = vmatpush1.bf16.msra.mxu0 %v2153
        %2169 = vmatprep.subr.bf16.mxu0 0
        %2170 = vmatpush1.bf16.msra.mxu0 %v2154
        %2171 = vmatprep.subr.bf16.mxu0 0
        %2172 = vmatpush1.bf16.msra.mxu0 0
        %2173 = vmatprep.subr.bf16.mxu0 0
        %2174 = vmatpush1.bf16.msra.mxu0 0
        %2175 = vmatprep.subr.bf16.mxu0 0
        %2176 = vmatpush1.bf16.msra.mxu0 0
        %2177 = vmatprep.subr.bf16.mxu0 0
        %2178 = vmatpush1.bf16.msra.mxu0 0
        %2179 = vmatprep.subr.bf16.mxu0 0
        %2180 = vmatpush1.bf16.msra.mxu0 0
        %2181 = vmatprep.subr.bf16.mxu0 0
        %2182 = vmatpush1.bf16.msra.mxu0 0
        %2183 = vmatprep.subr.bf16.mxu0 0
        %2184 = vmatpush1.bf16.msra.mxu0 0
        %2185 = vmatprep.subr.bf16.mxu0 0
        %2186 = vmatpush1.bf16.msra.mxu0 0
        %2187 = vmatprep.subr.bf16.mxu0 0
        %2188 = vmatpush1.bf16.msra.mxu0 0
        %2189 = vmatprep.subr.bf16.mxu0 0
        %2190 = vmatpush1.bf16.msra.mxu0 0
        %2191 = vmatprep.subr.bf16.mxu0 0
        %2192 = vmatpush1.bf16.msra.mxu0 0
        %2193 = vmatprep.subr.bf16.mxu0 0
        %2194 = vmatpush1.bf16.msra.mxu0 0
        %2195 = vmatprep.mubr.bf16.mxu0 0
        %2196 = vmatmul.mubr.bf16.gmra.mrb[0].mxu0 %v2161
        %v2197 = vpop.f32.mrb[0].mxu0
        %v2198 = vadd.f32 %v2133, %v2197
        %v2199 = vpop.f32.mrb[0].mxu0
        %v2200 = vpop.f32.mrb[0].mxu0
        %v2201 = vpop.f32.mrb[0].mxu0
        %2202 = vdwg.mxu0
        %v2203 = vadd.f32 %v2014, %v2198
        %2204 = vst.msk [vmem:[%s750] sm:$0xff] %vm804, %v2203
        %p2205 = scmp.eq.s32.totalorder %s41, 1
        // Predicated region
        $region101: #{tpu_custom_call.1} parent=83 // pred_check
          %p2206 = pneg %p2205
        $region102: #{tpu_custom_call.1} parent=83 // pred_check_branch
          %2208 = sbr.rel (%p2206) target = $region104
        $region103: #{tpu_custom_call.1} parent=83 // pred_region
          %v2209 = vld [vmem:[%s750] sm:$0xff]
          %v2210 = vld [vmem:[%s14] sm:$0x1]
          %v2211 = vld [vmem:[%s15] sm:$0x1]
          %v2212 = vsel %vm804, %v2209, 0.0
          %2213 = vadd.xlane.f32.xlu0 %v2212
          %v2214 = vpop.xlane.xlu0 %2213
          %v2215 = vmul.f32 %v2214, %v808
          %v2216 = vsub.f32 %v2209, %v2215
          %v2217 = vmul.f32 %v2216, %v2216
          %v2218 = vsel %vm804, %v2217, 0.0
          %2219 = vadd.xlane.f32.xlu0 %v2218
          %v2220 = vpop.xlane.xlu0 %2219
          %v2221 = vmul.f32 %v2220, %v815
          %v2222 = vrsqrt.pop %v2221
          %v2223 = vmul.f32 %v2221, %v2222
          %vm2224 = vcmp.eq.f32.partialorder %v2221, inf
          %v2225 = vsel %vm2224, %v2221, %v2223
          %vm2226 = vcmp.eq.f32.partialorder %v2221, 0.0
          %v2227 = vand.u32 %v2221, 2147483648
          %v2228 = vsel %vm2226, %v2227, %v2225
          %v2229 = vadd.f32 %v2228, 1e-06
          %v2230 = vrcp.pop %v2229
          %v2232 = vlaneseq
          %v2233 = vshrl.u32 %v2232, 7
          %v2234 = vsub.s32 0, %v2233
          %v2235 = vrot.slane %v2210, %v2234
          %v2237 = vmul.f32 %v2235, %v2216
          %v2238 = vmul.f32 %v2237, %v2230
          %v2240 = vlaneseq
          %v2241 = vshrl.u32 %v2240, 7
          %v2242 = vsub.s32 0, %v2241
          %v2243 = vrot.slane %v2211, %v2242
          %v2245 = vadd.f32 %v2238, %v2243
          %2246 = vst.msk [vmem:[%s750] sm:$0xff] %vm804, %v2245
        $region104: #{tpu_custom_call.1} parent=83 // pred_fallthru
          _
        %s2247 = sand.u32 %s462, 1
        %s2248 = scalar_lea.sflag [#allocation4], %s2247
        %s2249 = sand.u32 %s462, 1
        %s2250 = smul.addr %s2249, 8
        %s2251 = scalar_lea.vmem [#allocation8], %s2250
        // Predicated region
        $region105: #{tpu_custom_call.1} parent=83 // pred_check
          %p2252 = pneg %p472
        $region106: #{tpu_custom_call.1} parent=83 // pred_check_branch
          %2254 = sbr.rel (%p2252) target = $region108
        $region107: #{tpu_custom_call.1} parent=83 // pred_region
          %s2256 = ssub.s32 128, 128
          %2257 = vsyncadd %s2248, %s2256
          %s2258 = smul.addr %s40, 128
          %s2259 = scalar_lea.hbm %s16, %s2258
          %s2261 = sshll.u32 %s2251, 4
          %s2262 = int_to_ptr.vmem [resolvable:$true] %s2261
          %2264 = dma.vmem_to_hbm [thread:$0]  %s2262, 128, %s2259, %s2248
        $region108: #{tpu_custom_call.1} parent=83 // pred_fallthru
          _
      $region84: #{tpu_custom_call.1} parent=5 // pred_fallthru
        _
      %p2265 = scmp.le.s32.totalorder 2, %s31
      // Predicated region
      $region109: #{tpu_custom_call.1} parent=5 // pred_check
        %p2266 = pneg %p2265
      $region110: #{tpu_custom_call.1} parent=5 // pred_check_branch
        %2268 = sbr.rel (%p2266) target = $region112
      $region111: #{tpu_custom_call.1} parent=5 // pred_region
        %s2269 = ssub.s32 %s31, 2
        // Predicated region
        $region113: #{tpu_custom_call.1} parent=111 // pred_check
          %p2270 = pneg %p478
        $region114: #{tpu_custom_call.1} parent=111 // pred_check_branch
          %2272 = sbr.rel (%p2270) target = $region116
        $region115: #{tpu_custom_call.1} parent=111 // pred_region
          %s2273 = sand.u32 %s463, 1
          %s2274 = scalar_lea.sflag [#allocation4], %s2273
          %s2275 = sand.u32 %s463, 1
          %s2276 = smul.addr %s2275, 8
          %s2277 = scalar_lea.vmem [#allocation8], %s2276
          %2278 = dma.done %s2274, 128
        $region116: #{tpu_custom_call.1} parent=111 // pred_fallthru
          _
      $region112: #{tpu_custom_call.1} parent=5 // pred_fallthru
        _
    $region6: #{tpu_custom_call.1} parent=1 // loop_footer
      %s35 = sadd.s32 1, %s31
    $region7: #{tpu_custom_call.1} parent=1 // loop_footer_branch
      %30 = sbr.rel target = $region3
    $region8: #{tpu_custom_call.1} parent=1 // loop_exit
      _
    %2279 = vsyncpa [#allocation3], 1
    %s2280 = scalar_lea.sflag [#allocation3], 1
    %2281 = vsyncpa %s2280, 1
    %2282 = vsyncpa [#allocation6], 1
    %s2283 = scalar_lea.sflag [#allocation6], 1
    %2284 = vsyncpa %s2283, 1
    %2285 = vsyncpa [#allocation4], 1
    %s2286 = scalar_lea.sflag [#allocation4], 1
    %2287 = vsyncpa %s2286, 1

</llo_original>
